<compile_context>
chip_gen: v6e
topology: v6e:2x2x1
jax: 0.10.0
libtpu: 0.0.40
codegen_flags: <defaults>
</compile_context>

<pallas_src>
import jax
import jax.numpy as jnp
from jax import lax
from jax.experimental import pallas as pl
from jax.experimental.pallas import tpu as pltpu

# ---------------- synthetic config (mirrors the PyTorch Model __init__) -----
N_VOCAB = 50
EMBED = 32          # config.embed
HIDDEN = 32         # config.hidden_size
NUM_LAYERS = 1
PAD_SIZE = 8        # config.pad_size == sequence length T
NUM_CLASSES = 4     # config.num_classes
BATCH = 2

VOCAB_PAD = 64      # vocab padded to a lane-friendly width for the one-hot matmul
BATCH_PAD = 8       # batch padded to a full sublane tile


def rcnn_kernel(idsf_ref,   # (T*8, 1) int32  time-major ids, forward order
                idsb_ref,   # (T*8, 1) int32  time-major ids, time-reversed
                twf_ref,    # (Vp, 8H)  table @ W_ih (fwd gate cols only) + fwd bias
                twb_ref,    # (Vp, 8H)  table @ W_ih (bwd gate cols only) + bwd bias
                tbl_ref,    # (Vp, E)   padded embedding table (for the pooling path)
                whh_ref,    # (4H, 8H)  hidden->gates, rows [0:2H]=0 (junk lanes)
                wfce_ref,   # (E, C)    fc weight, embedding rows
                wfch_ref,   # (4H, C)   fc weight, hidden rows (rows [0:2H]=0)
                bfc_ref,    # (1, C)
                out_ref):   # (B, C)
    TB = idsf_ref.shape[0]          # T * 8
    V, E = tbl_ref.shape            # padded vocab, embed dim
    HP, G = whh_ref.shape           # 4H (=128 lanes of state), 8H (=256 gate cols)
    H2 = HP // 2                    # 2H  (real concat-hidden width)
    BP = BATCH_PAD
    T = TB // BP
    B = out_ref.shape[0]

    # ---- in-kernel embedding gather: one-hot built from a lane-iota compare ----
    viota = lax.broadcasted_iota(jnp.int32, (TB, V), 1)
    oh_f = (viota == idsf_ref[...]).astype(jnp.float32)      # (T*8, Vp)
    oh_b = (viota == idsb_ref[...]).astype(jnp.float32)      # (T*8, Vp)

    # Pre-activations for every step, both directions, bias folded at pack time.
    # fwd gate columns read x_t, bwd gate columns read x_{T-1-t}: the direction
    # selection is encoded in the two one-hot/table pairs, so the recurrence
    # body contains no selects for it.
    pre = (jnp.dot(oh_f, twf_ref[...], preferred_element_type=jnp.float32) +
           jnp.dot(oh_b, twb_ref[...], preferred_element_type=jnp.float32))   # (T*8, 8H)

    # Embeddings (forward order) are only needed for relu/max-over-time/fc.
    emb = jnp.dot(oh_f, tbl_ref[...], preferred_element_type=jnp.float32)     # (T*8, E)

    # max over time of relu(embed) == relu(max over time); 8-row tile-aligned slices
    maxe = emb[0:BP, :]
    for t in range(1, T):
        maxe = jnp.maximum(maxe, emb[t * BP:(t + 1) * BP, :])
    maxe = jnp.maximum(maxe, 0.0)                                             # (8, E)

    # ---- fused bidirectional recurrence with 128-lane-wide state ---------------
    # gate column layout: [i_f,i_b,f_f,f_b | g_f,g_b,o_f,o_b]  (two full vregs)
    # state layout:       c128 = [c_f,c_b,c_f,c_b]   (duplicated halves)
    #                     h128 = [junk , junk , h_f , h_b]
    whh = whh_ref[...]
    lane = lax.broadcasted_iota(jnp.int32, (BP, HP), 1)
    lo_mask = lane < H2                                     # hoisted select mask

    c128 = jnp.zeros((BP, HP), jnp.float32)
    h128 = jnp.zeros((BP, HP), jnp.float32)
    hmax = jnp.zeros((BP, HP), jnp.float32)                 # 0-init == relu built in

    for t in range(T):                                      # T=8: keep static unroll
        gates = pre[t * BP:(t + 1) * BP, :] + jnp.dot(
            h128, whh, preferred_element_type=jnp.float32)  # (8, 8H), tile-aligned
        sg1 = jax.nn.sigmoid(gates[:, :HP])                 # [ i | f ]  full vreg
        v2 = gates[:, HP:]
        sg2 = jax.nn.sigmoid(v2)                            # [ . | o ]  full vreg
        tg2 = jnp.tanh(v2)                                  # [ g | . ]  full vreg
        m = jnp.where(lo_mask, tg2, c128)                   # [ g | c ]
        p = sg1 * m                                         # [ i*g | f*c ]
        c128 = p + pltpu.roll(p, shift=H2, axis=1)          # [ c' | c' ] (one XLU roll)
        h128 = sg2 * jnp.tanh(c128)                         # [ junk | o*tanh(c') ]
        hmax = jnp.maximum(hmax, h128)                      # running max over time

    # pooled fc: embed part + hidden part (junk lanes hit zero rows of wfch)
    logits = (jnp.dot(maxe, wfce_ref[...], preferred_element_type=jnp.float32) +
              jnp.dot(hmax, wfch_ref[...], preferred_element_type=jnp.float32) +
              bfc_ref[...])                                  # (8, C)
    out_ref[...] = logits[0:B, :].astype(out_ref.dtype)      # real batch rows only


def init_params(key):
    """Canonical (PyTorch-like) parameters, gate order [i, f, g, o]."""
    ks = jax.random.split(key, 12)
    bound_lstm = 1.0 / jnp.sqrt(HIDDEN)
    bound_fc = 1.0 / jnp.sqrt(HIDDEN * 2 + EMBED)

    def u(k, shape, bound):
        return jax.random.uniform(k, shape, jnp.float32, -bound, bound)

    embedding = jax.random.normal(ks[0], (N_VOCAB, EMBED), jnp.float32)
    embedding = embedding.at[N_VOCAB - 1].set(0.0)  # padding_idx row

    params = dict(
        embedding=embedding,
        # forward direction (PyTorch weight_ih_l0 is (4H, E); stored transposed)
        wih_f=u(ks[1], (EMBED, 4 * HIDDEN), bound_lstm),
        whh_f=u(ks[2], (HIDDEN, 4 * HIDDEN), bound_lstm),
        bf=u(ks[3], (1, 4 * HIDDEN), bound_lstm) + u(ks[4], (1, 4 * HIDDEN), bound_lstm),
        # backward direction
        wih_b=u(ks[5], (EMBED, 4 * HIDDEN), bound_lstm),
        whh_b=u(ks[6], (HIDDEN, 4 * HIDDEN), bound_lstm),
        bb=u(ks[7], (1, 4 * HIDDEN), bound_lstm) + u(ks[8], (1, 4 * HIDDEN), bound_lstm),
        # fc: (C, E+2H) in torch; transposed here
        wfc=u(ks[9], (EMBED + 2 * HIDDEN, NUM_CLASSES), bound_fc),
        bfc=u(ks[10], (1, NUM_CLASSES), bound_fc),
    )
    return params


def pack_params(params):
    """Repack canonical params into the fused kernel layout (done once)."""
    H, E, C = HIDDEN, EMBED, NUM_CLASSES
    hp = jax.lax.Precision.HIGHEST

    def blocks(w):  # canonical gate order along last axis: [i, f, g, o]
        return (w[..., 0:H], w[..., H:2 * H], w[..., 2 * H:3 * H], w[..., 3 * H:4 * H])

    zE = jnp.zeros((E, H), jnp.float32)
    z1 = jnp.zeros((1, H), jnp.float32)
    zH = jnp.zeros((H, H), jnp.float32)

    # packed gate-column layout: [i_f,i_b,f_f,f_b | g_f,g_b,o_f,o_b]
    i_f, f_f, g_f, o_f = blocks(params['wih_f'])
    i_b, f_b, g_b, o_b = blocks(params['wih_b'])
    wih_fcols = jnp.concatenate([i_f, zE, f_f, zE, g_f, zE, o_f, zE], axis=1)  # fwd cols
    wih_bcols = jnp.concatenate([zE, i_b, zE, f_b, zE, g_b, zE, o_b], axis=1)  # bwd cols

    bi_f, bf_f, bg_f, bo_f = blocks(params['bf'])
    bi_b, bf_b, bg_b, bo_b = blocks(params['bb'])
    b_fcols = jnp.concatenate([bi_f, z1, bf_f, z1, bg_f, z1, bo_f, z1], axis=1)
    b_bcols = jnp.concatenate([z1, bi_b, z1, bf_b, z1, bg_b, z1, bo_b], axis=1)

    tbl = jnp.zeros((VOCAB_PAD, E), jnp.float32).at[:N_VOCAB].set(params['embedding'])

    # Fold table @ W_ih (+ per-direction bias) at pack time; the in-kernel gather
    # becomes a one-hot matmul against these tables (each one-hot row has exactly
    # one 1, so the folded bias is picked up exactly once per direction).
    twf = jnp.dot(tbl, wih_fcols, precision=hp) + b_fcols     # (Vp, 8H)
    twb = jnp.dot(tbl, wih_bcols, precision=hp) + b_bcols     # (Vp, 8H)

    hi_f, hf_f, hg_f, ho_f = blocks(params['whh_f'])
    hi_b, hf_b, hg_b, ho_b = blocks(params['whh_b'])
    top = jnp.concatenate([hi_f, zH, hf_f, zH, hg_f, zH, ho_f, zH], axis=1)   # h_f rows
    bot = jnp.concatenate([zH, hi_b, zH, hf_b, zH, hg_b, zH, ho_b], axis=1)   # h_b rows
    # rows [0:2H] are zero so the junk half of the 128-lane h state never contributes
    whh = jnp.concatenate([jnp.zeros((2 * H, 8 * H), jnp.float32), top, bot], axis=0)

    wfce = params['wfc'][:E, :]                                               # (E, C)
    wfch = jnp.concatenate([jnp.zeros((2 * H, C), jnp.float32),
                            params['wfc'][E:, :]], axis=0)                    # (4H, C)

    return dict(twf=twf, twb=twb, tbl=tbl, whh=whh, wfce=wfce, wfch=wfch,
                bfc=params['bfc'])


@jax.jit
def textrcnn_forward(ids, packed):
    B, T = ids.shape
    pad_id = N_VOCAB - 1   # padding_idx (zero embedding row) for the padded batch rows
    # time-major, batch tile-padded to 8 sublanes (tiny int prep; no activation gather)
    ids_tm = jnp.full((T, BATCH_PAD), pad_id, jnp.int32).at[:, :B].set(ids.T)
    ids_f = ids_tm.reshape(T * BATCH_PAD, 1)
    ids_b = ids_tm[::-1].reshape(T * BATCH_PAD, 1)

    vmem = pl.BlockSpec(memory_space=pltpu.MemorySpace.VMEM)
    return pl.pallas_call(
        rcnn_kernel,
        out_shape=jax.ShapeDtypeStruct((B, NUM_CLASSES), jnp.float32),
        in_specs=[vmem] * 9,
        out_specs=vmem,
    )(ids_f, ids_b, packed['twf'], packed['twb'], packed['tbl'],
      packed['whh'], packed['wfce'], packed['wfch'], packed['bfc'])


def textrcnn_reference(ids, params):
    """Pure-JAX reference with identical semantics (canonical params)."""
    emb = jnp.take(params['embedding'], ids, axis=0)          # (B, T, E)
    B, T, _ = emb.shape
    H = HIDDEN

    def run_dir(wih, whh, b, reverse):
        xs = emb[:, ::-1, :] if reverse else emb

        def step(carry, x_t):
            h, c = carry
            gates = x_t @ wih + h @ whh + b
            i_g = jax.nn.sigmoid(gates[:, 0 * H:1 * H])
            f_g = jax.nn.sigmoid(gates[:, 1 * H:2 * H])
            g_g = jnp.tanh(gates[:, 2 * H:3 * H])
            o_g = jax.nn.sigmoid(gates[:, 3 * H:4 * H])
            c = f_g * c + i_g * g_g
            h = o_g * jnp.tanh(c)
            return (h, c), h

        init = (jnp.zeros((B, H)), jnp.zeros((B, H)))
        _, hs = lax.scan(step, init, jnp.transpose(xs, (1, 0, 2)))
        hs = jnp.transpose(hs, (1, 0, 2))                     # (B, T, H)
        return hs[:, ::-1, :] if reverse else hs

    h_f = run_dir(params['wih_f'], params['whh_f'], params['bf'], False)
    h_b = run_dir(params['wih_b'], params['whh_b'], params['bb'], True)
    out = jnp.concatenate([emb, h_f, h_b], axis=2)            # (B, T, E+2H)
    out = jnp.maximum(out, 0.0)
    out = jnp.transpose(out, (0, 2, 1))                       # (B, E+2H, T)
    out = jnp.max(out, axis=2)                                # maxpool(T) + squeeze
    return out @ params['wfc'] + params['bfc']


if __name__ == "__main__":
    key = jax.random.PRNGKey(0)
    k_param, k_ids = jax.random.split(key)
    params = init_params(k_param)
    packed = jax.tree_util.tree_map(jax.block_until_ready, pack_params(params))

    ids = jax.random.randint(k_ids, (BATCH, PAD_SIZE), 0, N_VOCAB, dtype=jnp.int32)
    seq_len = jnp.full((BATCH,), PAD_SIZE, dtype=jnp.int32)   # forward does `x, _ = x`
    x = (ids, seq_len)

    out = jax.block_until_ready(textrcnn_forward(x[0], packed))
    ref = jax.block_until_ready(textrcnn_reference(x[0], params))

    assert out.shape == (BATCH, NUM_CLASSES), out.shape
    assert jnp.allclose(out, ref, atol=2e-4, rtol=2e-4), (out, ref)
    print("KERNEL_OK")
</pallas_src>

<mosaic_0001>
module attributes {stable_mosaic.version = 11 : i64} {
  func.func @rcnn_kernel(%arg0: memref<64x1xi32, #tpu.memory_space<vmem>>, %arg1: memref<64x1xi32, #tpu.memory_space<vmem>>, %arg2: memref<64x256xf32, #tpu.memory_space<vmem>>, %arg3: memref<64x256xf32, #tpu.memory_space<vmem>>, %arg4: memref<64x32xf32, #tpu.memory_space<vmem>>, %arg5: memref<128x256xf32, #tpu.memory_space<vmem>>, %arg6: memref<32x4xf32, #tpu.memory_space<vmem>>, %arg7: memref<128x4xf32, #tpu.memory_space<vmem>>, %arg8: memref<1x4xf32, #tpu.memory_space<vmem>>, %arg9: memref<2x4xf32, #tpu.memory_space<vmem>>) attributes {dimension_semantics = [], scalar_prefetch = 0 : i64, scratch_operands = 0 : i64, tpu.core_type = #tpu.core_type<tc>} {
    %0 = tpu.iota {dimensions = array<i32: 1>} : vector<64x64xi32>
    %c0 = arith.constant 0 : index
    %c0_0 = arith.constant 0 : index
    %1 = vector.load %arg0[%c0, %c0_0] : memref<64x1xi32, #tpu.memory_space<vmem>>, vector<64x1xi32>
    %2 = vector.broadcast %1 : vector<64x1xi32> to vector<64x64xi32>
    %3 = arith.cmpi eq, %0, %2 : vector<64x64xi32>
    %4 = arith.extui %3 : vector<64x64xi1> to vector<64x64xi32>
    %5 = arith.sitofp %4 : vector<64x64xi32> to vector<64x64xf32>
    %c0_1 = arith.constant 0 : index
    %c0_2 = arith.constant 0 : index
    %6 = vector.load %arg1[%c0_1, %c0_2] : memref<64x1xi32, #tpu.memory_space<vmem>>, vector<64x1xi32>
    %7 = vector.broadcast %6 : vector<64x1xi32> to vector<64x64xi32>
    %8 = arith.cmpi eq, %0, %7 : vector<64x64xi32>
    %9 = arith.extui %8 : vector<64x64xi1> to vector<64x64xi32>
    %10 = arith.sitofp %9 : vector<64x64xi32> to vector<64x64xf32>
    %c0_3 = arith.constant 0 : index
    %c0_4 = arith.constant 0 : index
    %11 = vector.load %arg2[%c0_3, %c0_4] : memref<64x256xf32, #tpu.memory_space<vmem>>, vector<64x256xf32>
    %cst = arith.constant dense<0.000000e+00> : vector<64x256xf32>
    %12 = tpu.matmul %5, %11, %cst {dimension_numbers = #tpu.dot_dimension_numbers<[1], [0], [0], [1], [0, 0, 1, 1], [], []>} : vector<64x64xf32>, vector<64x256xf32>, vector<64x256xf32> -> vector<64x256xf32>
    %c0_5 = arith.constant 0 : index
    %c0_6 = arith.constant 0 : index
    %13 = vector.load %arg3[%c0_5, %c0_6] : memref<64x256xf32, #tpu.memory_space<vmem>>, vector<64x256xf32>
    %cst_7 = arith.constant dense<0.000000e+00> : vector<64x256xf32>
    %14 = tpu.matmul %10, %13, %cst_7 {dimension_numbers = #tpu.dot_dimension_numbers<[1], [0], [0], [1], [0, 0, 1, 1], [], []>} : vector<64x64xf32>, vector<64x256xf32>, vector<64x256xf32> -> vector<64x256xf32>
    %15 = arith.addf %12, %14 : vector<64x256xf32>
    %c0_8 = arith.constant 0 : index
    %c0_9 = arith.constant 0 : index
    %16 = vector.load %arg4[%c0_8, %c0_9] : memref<64x32xf32, #tpu.memory_space<vmem>>, vector<64x32xf32>
    %cst_10 = arith.constant dense<0.000000e+00> : vector<64x32xf32>
    %17 = tpu.matmul %5, %16, %cst_10 {dimension_numbers = #tpu.dot_dimension_numbers<[1], [0], [0], [1], [0, 0, 1, 1], [], []>} : vector<64x64xf32>, vector<64x32xf32>, vector<64x32xf32> -> vector<64x32xf32>
    %18 = vector.extract_strided_slice %17 {offsets = [0, 0], sizes = [8, 32], strides = [1, 1]} : vector<64x32xf32> to vector<8x32xf32>
    %19 = vector.extract_strided_slice %17 {offsets = [8, 0], sizes = [8, 32], strides = [1, 1]} : vector<64x32xf32> to vector<8x32xf32>
    %20 = arith.maximumf %18, %19 : vector<8x32xf32>
    %21 = vector.extract_strided_slice %17 {offsets = [16, 0], sizes = [8, 32], strides = [1, 1]} : vector<64x32xf32> to vector<8x32xf32>
    %22 = arith.maximumf %20, %21 : vector<8x32xf32>
    %23 = vector.extract_strided_slice %17 {offsets = [24, 0], sizes = [8, 32], strides = [1, 1]} : vector<64x32xf32> to vector<8x32xf32>
    %24 = arith.maximumf %22, %23 : vector<8x32xf32>
    %25 = vector.extract_strided_slice %17 {offsets = [32, 0], sizes = [8, 32], strides = [1, 1]} : vector<64x32xf32> to vector<8x32xf32>
    %26 = arith.maximumf %24, %25 : vector<8x32xf32>
    %27 = vector.extract_strided_slice %17 {offsets = [40, 0], sizes = [8, 32], strides = [1, 1]} : vector<64x32xf32> to vector<8x32xf32>
    %28 = arith.maximumf %26, %27 : vector<8x32xf32>
    %29 = vector.extract_strided_slice %17 {offsets = [48, 0], sizes = [8, 32], strides = [1, 1]} : vector<64x32xf32> to vector<8x32xf32>
    %30 = arith.maximumf %28, %29 : vector<8x32xf32>
    %31 = vector.extract_strided_slice %17 {offsets = [56, 0], sizes = [8, 32], strides = [1, 1]} : vector<64x32xf32> to vector<8x32xf32>
    %32 = arith.maximumf %30, %31 : vector<8x32xf32>
    %cst_11 = arith.constant 0.000000e+00 : f32
    %33 = vector.broadcast %cst_11 : f32 to vector<8x32xf32>
    %34 = arith.maximumf %32, %33 : vector<8x32xf32>
    %c0_12 = arith.constant 0 : index
    %c0_13 = arith.constant 0 : index
    %35 = vector.load %arg5[%c0_12, %c0_13] : memref<128x256xf32, #tpu.memory_space<vmem>>, vector<128x256xf32>
    %36 = tpu.iota {dimensions = array<i32: 1>} : vector<8x128xi32>
    %c64_i32 = arith.constant 64 : i32
    %37 = vector.broadcast %c64_i32 : i32 to vector<8x128xi32>
    %38 = arith.cmpi slt, %36, %37 : vector<8x128xi32>
    %cst_14 = arith.constant 0.000000e+00 : f32
    %39 = vector.broadcast %cst_14 : f32 to vector<8x128xf32>
    %cst_15 = arith.constant 0.000000e+00 : f32
    %40 = vector.broadcast %cst_15 : f32 to vector<8x128xf32>
    %cst_16 = arith.constant 0.000000e+00 : f32
    %41 = vector.broadcast %cst_16 : f32 to vector<8x128xf32>
    %42 = vector.extract_strided_slice %15 {offsets = [0, 0], sizes = [8, 256], strides = [1, 1]} : vector<64x256xf32> to vector<8x256xf32>
    %cst_17 = arith.constant dense<0.000000e+00> : vector<8x256xf32>
    %43 = tpu.matmul %40, %35, %cst_17 {dimension_numbers = #tpu.dot_dimension_numbers<[1], [0], [0], [1], [0, 0, 1, 1], [], []>} : vector<8x128xf32>, vector<128x256xf32>, vector<8x256xf32> -> vector<8x256xf32>
    %44 = arith.addf %42, %43 : vector<8x256xf32>
    %45 = vector.extract_strided_slice %44 {offsets = [0, 0], sizes = [8, 128], strides = [1, 1]} : vector<8x256xf32> to vector<8x128xf32>
    %46 = arith.negf %45 : vector<8x128xf32>
    %47 = math.exp %46 : vector<8x128xf32>
    %cst_18 = arith.constant 1.000000e+00 : f32
    %48 = vector.broadcast %cst_18 : f32 to vector<8x128xf32>
    %49 = arith.addf %48, %47 : vector<8x128xf32>
    %50 = arith.divf %48, %49 : vector<8x128xf32>
    %51 = vector.extract_strided_slice %44 {offsets = [0, 128], sizes = [8, 128], strides = [1, 1]} : vector<8x256xf32> to vector<8x128xf32>
    %52 = arith.negf %51 : vector<8x128xf32>
    %53 = math.exp %52 : vector<8x128xf32>
    %cst_19 = arith.constant 1.000000e+00 : f32
    %54 = vector.broadcast %cst_19 : f32 to vector<8x128xf32>
    %55 = arith.addf %54, %53 : vector<8x128xf32>
    %56 = arith.divf %54, %55 : vector<8x128xf32>
    %57 = math.tanh %51 : vector<8x128xf32>
    %58 = arith.select %38, %57, %39 : vector<8x128xi1>, vector<8x128xf32>
    %59 = arith.mulf %50, %58 : vector<8x128xf32>
    %c64_i32_20 = arith.constant 64 : i32
    %60 = tpu.dynamic_rotate %59 by %c64_i32_20 dim 1 : vector<8x128xf32>, i32 -> vector<8x128xf32>
    %61 = arith.addf %59, %60 : vector<8x128xf32>
    %62 = math.tanh %61 : vector<8x128xf32>
    %63 = arith.mulf %56, %62 : vector<8x128xf32>
    %64 = arith.maximumf %41, %63 : vector<8x128xf32>
    %65 = vector.extract_strided_slice %15 {offsets = [8, 0], sizes = [8, 256], strides = [1, 1]} : vector<64x256xf32> to vector<8x256xf32>
    %cst_21 = arith.constant dense<0.000000e+00> : vector<8x256xf32>
    %66 = tpu.matmul %63, %35, %cst_21 {dimension_numbers = #tpu.dot_dimension_numbers<[1], [0], [0], [1], [0, 0, 1, 1], [], []>} : vector<8x128xf32>, vector<128x256xf32>, vector<8x256xf32> -> vector<8x256xf32>
    %67 = arith.addf %65, %66 : vector<8x256xf32>
    %68 = vector.extract_strided_slice %67 {offsets = [0, 0], sizes = [8, 128], strides = [1, 1]} : vector<8x256xf32> to vector<8x128xf32>
    %69 = arith.negf %68 : vector<8x128xf32>
    %70 = math.exp %69 : vector<8x128xf32>
    %cst_22 = arith.constant 1.000000e+00 : f32
    %71 = vector.broadcast %cst_22 : f32 to vector<8x128xf32>
    %72 = arith.addf %71, %70 : vector<8x128xf32>
    %73 = arith.divf %71, %72 : vector<8x128xf32>
    %74 = vector.extract_strided_slice %67 {offsets = [0, 128], sizes = [8, 128], strides = [1, 1]} : vector<8x256xf32> to vector<8x128xf32>
    %75 = arith.negf %74 : vector<8x128xf32>
    %76 = math.exp %75 : vector<8x128xf32>
    %cst_23 = arith.constant 1.000000e+00 : f32
    %77 = vector.broadcast %cst_23 : f32 to vector<8x128xf32>
    %78 = arith.addf %77, %76 : vector<8x128xf32>
    %79 = arith.divf %77, %78 : vector<8x128xf32>
    %80 = math.tanh %74 : vector<8x128xf32>
    %81 = arith.select %38, %80, %61 : vector<8x128xi1>, vector<8x128xf32>
    %82 = arith.mulf %73, %81 : vector<8x128xf32>
    %c64_i32_24 = arith.constant 64 : i32
    %83 = tpu.dynamic_rotate %82 by %c64_i32_24 dim 1 : vector<8x128xf32>, i32 -> vector<8x128xf32>
    %84 = arith.addf %82, %83 : vector<8x128xf32>
    %85 = math.tanh %84 : vector<8x128xf32>
    %86 = arith.mulf %79, %85 : vector<8x128xf32>
    %87 = arith.maximumf %64, %86 : vector<8x128xf32>
    %88 = vector.extract_strided_slice %15 {offsets = [16, 0], sizes = [8, 256], strides = [1, 1]} : vector<64x256xf32> to vector<8x256xf32>
    %cst_25 = arith.constant dense<0.000000e+00> : vector<8x256xf32>
    %89 = tpu.matmul %86, %35, %cst_25 {dimension_numbers = #tpu.dot_dimension_numbers<[1], [0], [0], [1], [0, 0, 1, 1], [], []>} : vector<8x128xf32>, vector<128x256xf32>, vector<8x256xf32> -> vector<8x256xf32>
    %90 = arith.addf %88, %89 : vector<8x256xf32>
    %91 = vector.extract_strided_slice %90 {offsets = [0, 0], sizes = [8, 128], strides = [1, 1]} : vector<8x256xf32> to vector<8x128xf32>
    %92 = arith.negf %91 : vector<8x128xf32>
    %93 = math.exp %92 : vector<8x128xf32>
    %cst_26 = arith.constant 1.000000e+00 : f32
    %94 = vector.broadcast %cst_26 : f32 to vector<8x128xf32>
    %95 = arith.addf %94, %93 : vector<8x128xf32>
    %96 = arith.divf %94, %95 : vector<8x128xf32>
    %97 = vector.extract_strided_slice %90 {offsets = [0, 128], sizes = [8, 128], strides = [1, 1]} : vector<8x256xf32> to vector<8x128xf32>
    %98 = arith.negf %97 : vector<8x128xf32>
    %99 = math.exp %98 : vector<8x128xf32>
    %cst_27 = arith.constant 1.000000e+00 : f32
    %100 = vector.broadcast %cst_27 : f32 to vector<8x128xf32>
    %101 = arith.addf %100, %99 : vector<8x128xf32>
    %102 = arith.divf %100, %101 : vector<8x128xf32>
    %103 = math.tanh %97 : vector<8x128xf32>
    %104 = arith.select %38, %103, %84 : vector<8x128xi1>, vector<8x128xf32>
    %105 = arith.mulf %96, %104 : vector<8x128xf32>
    %c64_i32_28 = arith.constant 64 : i32
    %106 = tpu.dynamic_rotate %105 by %c64_i32_28 dim 1 : vector<8x128xf32>, i32 -> vector<8x128xf32>
    %107 = arith.addf %105, %106 : vector<8x128xf32>
    %108 = math.tanh %107 : vector<8x128xf32>
    %109 = arith.mulf %102, %108 : vector<8x128xf32>
    %110 = arith.maximumf %87, %109 : vector<8x128xf32>
    %111 = vector.extract_strided_slice %15 {offsets = [24, 0], sizes = [8, 256], strides = [1, 1]} : vector<64x256xf32> to vector<8x256xf32>
    %cst_29 = arith.constant dense<0.000000e+00> : vector<8x256xf32>
    %112 = tpu.matmul %109, %35, %cst_29 {dimension_numbers = #tpu.dot_dimension_numbers<[1], [0], [0], [1], [0, 0, 1, 1], [], []>} : vector<8x128xf32>, vector<128x256xf32>, vector<8x256xf32> -> vector<8x256xf32>
    %113 = arith.addf %111, %112 : vector<8x256xf32>
    %114 = vector.extract_strided_slice %113 {offsets = [0, 0], sizes = [8, 128], strides = [1, 1]} : vector<8x256xf32> to vector<8x128xf32>
    %115 = arith.negf %114 : vector<8x128xf32>
    %116 = math.exp %115 : vector<8x128xf32>
    %cst_30 = arith.constant 1.000000e+00 : f32
    %117 = vector.broadcast %cst_30 : f32 to vector<8x128xf32>
    %118 = arith.addf %117, %116 : vector<8x128xf32>
    %119 = arith.divf %117, %118 : vector<8x128xf32>
    %120 = vector.extract_strided_slice %113 {offsets = [0, 128], sizes = [8, 128], strides = [1, 1]} : vector<8x256xf32> to vector<8x128xf32>
    %121 = arith.negf %120 : vector<8x128xf32>
    %122 = math.exp %121 : vector<8x128xf32>
    %cst_31 = arith.constant 1.000000e+00 : f32
    %123 = vector.broadcast %cst_31 : f32 to vector<8x128xf32>
    %124 = arith.addf %123, %122 : vector<8x128xf32>
    %125 = arith.divf %123, %124 : vector<8x128xf32>
    %126 = math.tanh %120 : vector<8x128xf32>
    %127 = arith.select %38, %126, %107 : vector<8x128xi1>, vector<8x128xf32>
    %128 = arith.mulf %119, %127 : vector<8x128xf32>
    %c64_i32_32 = arith.constant 64 : i32
    %129 = tpu.dynamic_rotate %128 by %c64_i32_32 dim 1 : vector<8x128xf32>, i32 -> vector<8x128xf32>
    %130 = arith.addf %128, %129 : vector<8x128xf32>
    %131 = math.tanh %130 : vector<8x128xf32>
    %132 = arith.mulf %125, %131 : vector<8x128xf32>
    %133 = arith.maximumf %110, %132 : vector<8x128xf32>
    %134 = vector.extract_strided_slice %15 {offsets = [32, 0], sizes = [8, 256], strides = [1, 1]} : vector<64x256xf32> to vector<8x256xf32>
    %cst_33 = arith.constant dense<0.000000e+00> : vector<8x256xf32>
    %135 = tpu.matmul %132, %35, %cst_33 {dimension_numbers = #tpu.dot_dimension_numbers<[1], [0], [0], [1], [0, 0, 1, 1], [], []>} : vector<8x128xf32>, vector<128x256xf32>, vector<8x256xf32> -> vector<8x256xf32>
    %136 = arith.addf %134, %135 : vector<8x256xf32>
    %137 = vector.extract_strided_slice %136 {offsets = [0, 0], sizes = [8, 128], strides = [1, 1]} : vector<8x256xf32> to vector<8x128xf32>
    %138 = arith.negf %137 : vector<8x128xf32>
    %139 = math.exp %138 : vector<8x128xf32>
    %cst_34 = arith.constant 1.000000e+00 : f32
    %140 = vector.broadcast %cst_34 : f32 to vector<8x128xf32>
    %141 = arith.addf %140, %139 : vector<8x128xf32>
    %142 = arith.divf %140, %141 : vector<8x128xf32>
    %143 = vector.extract_strided_slice %136 {offsets = [0, 128], sizes = [8, 128], strides = [1, 1]} : vector<8x256xf32> to vector<8x128xf32>
    %144 = arith.negf %143 : vector<8x128xf32>
    %145 = math.exp %144 : vector<8x128xf32>
    %cst_35 = arith.constant 1.000000e+00 : f32
    %146 = vector.broadcast %cst_35 : f32 to vector<8x128xf32>
    %147 = arith.addf %146, %145 : vector<8x128xf32>
    %148 = arith.divf %146, %147 : vector<8x128xf32>
    %149 = math.tanh %143 : vector<8x128xf32>
    %150 = arith.select %38, %149, %130 : vector<8x128xi1>, vector<8x128xf32>
    %151 = arith.mulf %142, %150 : vector<8x128xf32>
    %c64_i32_36 = arith.constant 64 : i32
    %152 = tpu.dynamic_rotate %151 by %c64_i32_36 dim 1 : vector<8x128xf32>, i32 -> vector<8x128xf32>
    %153 = arith.addf %151, %152 : vector<8x128xf32>
    %154 = math.tanh %153 : vector<8x128xf32>
    %155 = arith.mulf %148, %154 : vector<8x128xf32>
    %156 = arith.maximumf %133, %155 : vector<8x128xf32>
    %157 = vector.extract_strided_slice %15 {offsets = [40, 0], sizes = [8, 256], strides = [1, 1]} : vector<64x256xf32> to vector<8x256xf32>
    %cst_37 = arith.constant dense<0.000000e+00> : vector<8x256xf32>
    %158 = tpu.matmul %155, %35, %cst_37 {dimension_numbers = #tpu.dot_dimension_numbers<[1], [0], [0], [1], [0, 0, 1, 1], [], []>} : vector<8x128xf32>, vector<128x256xf32>, vector<8x256xf32> -> vector<8x256xf32>
    %159 = arith.addf %157, %158 : vector<8x256xf32>
    %160 = vector.extract_strided_slice %159 {offsets = [0, 0], sizes = [8, 128], strides = [1, 1]} : vector<8x256xf32> to vector<8x128xf32>
    %161 = arith.negf %160 : vector<8x128xf32>
    %162 = math.exp %161 : vector<8x128xf32>
    %cst_38 = arith.constant 1.000000e+00 : f32
    %163 = vector.broadcast %cst_38 : f32 to vector<8x128xf32>
    %164 = arith.addf %163, %162 : vector<8x128xf32>
    %165 = arith.divf %163, %164 : vector<8x128xf32>
    %166 = vector.extract_strided_slice %159 {offsets = [0, 128], sizes = [8, 128], strides = [1, 1]} : vector<8x256xf32> to vector<8x128xf32>
    %167 = arith.negf %166 : vector<8x128xf32>
    %168 = math.exp %167 : vector<8x128xf32>
    %cst_39 = arith.constant 1.000000e+00 : f32
    %169 = vector.broadcast %cst_39 : f32 to vector<8x128xf32>
    %170 = arith.addf %169, %168 : vector<8x128xf32>
    %171 = arith.divf %169, %170 : vector<8x128xf32>
    %172 = math.tanh %166 : vector<8x128xf32>
    %173 = arith.select %38, %172, %153 : vector<8x128xi1>, vector<8x128xf32>
    %174 = arith.mulf %165, %173 : vector<8x128xf32>
    %c64_i32_40 = arith.constant 64 : i32
    %175 = tpu.dynamic_rotate %174 by %c64_i32_40 dim 1 : vector<8x128xf32>, i32 -> vector<8x128xf32>
    %176 = arith.addf %174, %175 : vector<8x128xf32>
    %177 = math.tanh %176 : vector<8x128xf32>
    %178 = arith.mulf %171, %177 : vector<8x128xf32>
    %179 = arith.maximumf %156, %178 : vector<8x128xf32>
    %180 = vector.extract_strided_slice %15 {offsets = [48, 0], sizes = [8, 256], strides = [1, 1]} : vector<64x256xf32> to vector<8x256xf32>
    %cst_41 = arith.constant dense<0.000000e+00> : vector<8x256xf32>
    %181 = tpu.matmul %178, %35, %cst_41 {dimension_numbers = #tpu.dot_dimension_numbers<[1], [0], [0], [1], [0, 0, 1, 1], [], []>} : vector<8x128xf32>, vector<128x256xf32>, vector<8x256xf32> -> vector<8x256xf32>
    %182 = arith.addf %180, %181 : vector<8x256xf32>
    %183 = vector.extract_strided_slice %182 {offsets = [0, 0], sizes = [8, 128], strides = [1, 1]} : vector<8x256xf32> to vector<8x128xf32>
    %184 = arith.negf %183 : vector<8x128xf32>
    %185 = math.exp %184 : vector<8x128xf32>
    %cst_42 = arith.constant 1.000000e+00 : f32
    %186 = vector.broadcast %cst_42 : f32 to vector<8x128xf32>
    %187 = arith.addf %186, %185 : vector<8x128xf32>
    %188 = arith.divf %186, %187 : vector<8x128xf32>
    %189 = vector.extract_strided_slice %182 {offsets = [0, 128], sizes = [8, 128], strides = [1, 1]} : vector<8x256xf32> to vector<8x128xf32>
    %190 = arith.negf %189 : vector<8x128xf32>
    %191 = math.exp %190 : vector<8x128xf32>
    %cst_43 = arith.constant 1.000000e+00 : f32
    %192 = vector.broadcast %cst_43 : f32 to vector<8x128xf32>
    %193 = arith.addf %192, %191 : vector<8x128xf32>
    %194 = arith.divf %192, %193 : vector<8x128xf32>
    %195 = math.tanh %189 : vector<8x128xf32>
    %196 = arith.select %38, %195, %176 : vector<8x128xi1>, vector<8x128xf32>
    %197 = arith.mulf %188, %196 : vector<8x128xf32>
    %c64_i32_44 = arith.constant 64 : i32
    %198 = tpu.dynamic_rotate %197 by %c64_i32_44 dim 1 : vector<8x128xf32>, i32 -> vector<8x128xf32>
    %199 = arith.addf %197, %198 : vector<8x128xf32>
    %200 = math.tanh %199 : vector<8x128xf32>
    %201 = arith.mulf %194, %200 : vector<8x128xf32>
    %202 = arith.maximumf %179, %201 : vector<8x128xf32>
    %203 = vector.extract_strided_slice %15 {offsets = [56, 0], sizes = [8, 256], strides = [1, 1]} : vector<64x256xf32> to vector<8x256xf32>
    %cst_45 = arith.constant dense<0.000000e+00> : vector<8x256xf32>
    %204 = tpu.matmul %201, %35, %cst_45 {dimension_numbers = #tpu.dot_dimension_numbers<[1], [0], [0], [1], [0, 0, 1, 1], [], []>} : vector<8x128xf32>, vector<128x256xf32>, vector<8x256xf32> -> vector<8x256xf32>
    %205 = arith.addf %203, %204 : vector<8x256xf32>
    %206 = vector.extract_strided_slice %205 {offsets = [0, 0], sizes = [8, 128], strides = [1, 1]} : vector<8x256xf32> to vector<8x128xf32>
    %207 = arith.negf %206 : vector<8x128xf32>
    %208 = math.exp %207 : vector<8x128xf32>
    %cst_46 = arith.constant 1.000000e+00 : f32
    %209 = vector.broadcast %cst_46 : f32 to vector<8x128xf32>
    %210 = arith.addf %209, %208 : vector<8x128xf32>
    %211 = arith.divf %209, %210 : vector<8x128xf32>
    %212 = vector.extract_strided_slice %205 {offsets = [0, 128], sizes = [8, 128], strides = [1, 1]} : vector<8x256xf32> to vector<8x128xf32>
    %213 = arith.negf %212 : vector<8x128xf32>
    %214 = math.exp %213 : vector<8x128xf32>
    %cst_47 = arith.constant 1.000000e+00 : f32
    %215 = vector.broadcast %cst_47 : f32 to vector<8x128xf32>
    %216 = arith.addf %215, %214 : vector<8x128xf32>
    %217 = arith.divf %215, %216 : vector<8x128xf32>
    %218 = math.tanh %212 : vector<8x128xf32>
    %219 = arith.select %38, %218, %199 : vector<8x128xi1>, vector<8x128xf32>
    %220 = arith.mulf %211, %219 : vector<8x128xf32>
    %c64_i32_48 = arith.constant 64 : i32
    %221 = tpu.dynamic_rotate %220 by %c64_i32_48 dim 1 : vector<8x128xf32>, i32 -> vector<8x128xf32>
    %222 = arith.addf %220, %221 : vector<8x128xf32>
    %223 = math.tanh %222 : vector<8x128xf32>
    %224 = arith.mulf %217, %223 : vector<8x128xf32>
    %225 = arith.maximumf %202, %224 : vector<8x128xf32>
    %c0_49 = arith.constant 0 : index
    %c0_50 = arith.constant 0 : index
    %226 = vector.load %arg6[%c0_49, %c0_50] : memref<32x4xf32, #tpu.memory_space<vmem>>, vector<32x4xf32>
    %cst_51 = arith.constant dense<0.000000e+00> : vector<8x4xf32>
    %227 = tpu.matmul %34, %226, %cst_51 {dimension_numbers = #tpu.dot_dimension_numbers<[1], [0], [0], [1], [0, 0, 1, 1], [], []>} : vector<8x32xf32>, vector<32x4xf32>, vector<8x4xf32> -> vector<8x4xf32>
    %c0_52 = arith.constant 0 : index
    %c0_53 = arith.constant 0 : index
    %228 = vector.load %arg7[%c0_52, %c0_53] : memref<128x4xf32, #tpu.memory_space<vmem>>, vector<128x4xf32>
    %cst_54 = arith.constant dense<0.000000e+00> : vector<8x4xf32>
    %229 = tpu.matmul %225, %228, %cst_54 {dimension_numbers = #tpu.dot_dimension_numbers<[1], [0], [0], [1], [0, 0, 1, 1], [], []>} : vector<8x128xf32>, vector<128x4xf32>, vector<8x4xf32> -> vector<8x4xf32>
    %230 = arith.addf %227, %229 : vector<8x4xf32>
    %c0_55 = arith.constant 0 : index
    %c0_56 = arith.constant 0 : index
    %231 = vector.load %arg8[%c0_55, %c0_56] : memref<1x4xf32, #tpu.memory_space<vmem>>, vector<1x4xf32>
    %232 = vector.broadcast %231 : vector<1x4xf32> to vector<8x4xf32>
    %233 = arith.addf %230, %232 : vector<8x4xf32>
    %234 = vector.extract_strided_slice %233 {offsets = [0, 0], sizes = [2, 4], strides = [1, 1]} : vector<8x4xf32> to vector<2x4xf32>
    %c0_57 = arith.constant 0 : index
    %c0_58 = arith.constant 0 : index
    %235 = vector.load %arg9[%c0_57, %c0_58] : memref<2x4xf32, #tpu.memory_space<vmem>>, vector<2x4xf32>
    tpu.vector_store %arg9[%c0_57, %c0_58], %234 {strides = array<i32>} : memref<2x4xf32, #tpu.memory_space<vmem>>, vector<2x4xf32>,
    return
  }
}

</mosaic_0001>

<llo_original>
// kernel: textrcnn_forward.1
$region0: #{textrcnn_forward.1}
  #allocation0 [shape = 'u32[]', space=smem, size = 0x4, offset = 0x4, fixed_abs, tag = 'smem constant byte address 0x4 - core index']
  #allocation1 [shape = 'u32[144,128]{1,0:T(1,128)}', space=vmem, size = 0x12000, scoped, tag = 'internal scratch']
  %s0 = inlined_call_operand.vmem [shape: s32[64,1], index: 0, kind: input, shape index: {}]
  %s1 = inlined_call_operand.vmem [shape: s32[64,1], index: 1, kind: input, shape index: {}]
  %s2 = inlined_call_operand.vmem [shape: f32[64,256], index: 2, kind: input, shape index: {}]
  %s3 = inlined_call_operand.hbm [shape: f32[64,256], index: 3, kind: input, shape index: {}]
  %s4 = inlined_call_operand.vmem [shape: f32[64,32], index: 4, kind: input, shape index: {}]
  %s5 = inlined_call_operand.vmem [shape: f32[128,256], index: 5, kind: input, shape index: {}]
  %s6 = inlined_call_operand.vmem [shape: f32[32,4], index: 6, kind: input, shape index: {}]
  %s7 = inlined_call_operand.vmem [shape: f32[128,4], index: 7, kind: input, shape index: {}]
  %s8 = inlined_call_operand.vmem [shape: f32[1,4], index: 8, kind: input, shape index: {}]
  %s9 = inlined_call_operand.hbm [shape: f32[2,4], index: 9, kind: output, shape index: {}]
  %s10 = sld [smem:[#allocation0]]
  $region50: #{textrcnn_forward.1} parent=0
    _
  %s12 = ssub.s32 1, %s10
  %s13 = scalar_select 0, %s12, %s10
  $region1: #{textrcnn_forward.1} parent=0
    #allocation2 [shape = 'u8[65536]{0}', space=vmem, size = 0x10000, scoped, tag = 'input window, operand 3, single buffered']
    #allocation3 [shape = 's32[1]{0}', space=sflag, size = 0x4, scoped, tag = 'scoped memory for textrcnn_forward.1']
    #allocation4 [shape = 's32[1]{0}', space=sflag, size = 0x4, scoped, tag = 'scoped memory for textrcnn_forward.1']
    #allocation5 [shape = 'u8[1024]{0}', space=vmem, size = 0x400, scoped, tag = 'output window, operand 0, single buffered']
    %14 = vsyncpa [#allocation3], 0
    %15 = vsyncpa [#allocation4], 0
    // Predicated region
    $region2: #{textrcnn_forward.1} parent=1 // pred_check
      _
    $region3: #{textrcnn_forward.1} parent=1 // pred_check_branch
      %17 = sbr.rel (0) target = $region5
    $region4: #{textrcnn_forward.1} parent=1 // pred_region
      _
    $region5: #{textrcnn_forward.1} parent=1 // pred_fallthru
      _
    // Predicated region
    $region6: #{textrcnn_forward.1} parent=1 // pred_check
      _
    $region7: #{textrcnn_forward.1} parent=1 // pred_check_branch
      %19 = sbr.rel (0) target = $region9
    $region8: #{textrcnn_forward.1} parent=1 // pred_region
      _
    $region9: #{textrcnn_forward.1} parent=1 // pred_fallthru
      _
    // Predicated region
    $region10: #{textrcnn_forward.1} parent=1 // pred_check
      _
    $region11: #{textrcnn_forward.1} parent=1 // pred_check_branch
      %21 = sbr.rel (0) target = $region13
    $region12: #{textrcnn_forward.1} parent=1 // pred_region
      _
    $region13: #{textrcnn_forward.1} parent=1 // pred_fallthru
      _
    // Predicated region
    $region14: #{textrcnn_forward.1} parent=1 // pred_check
      _
    $region15: #{textrcnn_forward.1} parent=1 // pred_check_branch
      %23 = sbr.rel (0) target = $region17
    $region16: #{textrcnn_forward.1} parent=1 // pred_region
      %s25 = ssub.s32 2048, 2048
      %26 = vsyncadd [#allocation3], %s25
      %s27 = sshll.u32 [#allocation2], 4
      %s28 = int_to_ptr.vmem [resolvable:$true] %s27
      %33 = dma.hbm_to_vmem [thread:$0]  %s3, 2048, %s28, [#allocation3], 256, 256, 16
    $region17: #{textrcnn_forward.1} parent=1 // pred_fallthru
      _
    // Predicated region
    $region18: #{textrcnn_forward.1} parent=1 // pred_check
      _
    $region19: #{textrcnn_forward.1} parent=1 // pred_check_branch
      %35 = sbr.rel (0) target = $region21
    $region20: #{textrcnn_forward.1} parent=1 // pred_region
      _
    $region21: #{textrcnn_forward.1} parent=1 // pred_fallthru
      _
    // Predicated region
    $region22: #{textrcnn_forward.1} parent=1 // pred_check
      _
    $region23: #{textrcnn_forward.1} parent=1 // pred_check_branch
      %37 = sbr.rel (0) target = $region25
    $region24: #{textrcnn_forward.1} parent=1 // pred_region
      _
    $region25: #{textrcnn_forward.1} parent=1 // pred_fallthru
      _
    // Predicated region
    $region26: #{textrcnn_forward.1} parent=1 // pred_check
      _
    $region27: #{textrcnn_forward.1} parent=1 // pred_check_branch
      %39 = sbr.rel (0) target = $region29
    $region28: #{textrcnn_forward.1} parent=1 // pred_region
      _
    $region29: #{textrcnn_forward.1} parent=1 // pred_fallthru
      _
    // Predicated region
    $region30: #{textrcnn_forward.1} parent=1 // pred_check
      _
    $region31: #{textrcnn_forward.1} parent=1 // pred_check_branch
      %41 = sbr.rel (0) target = $region33
    $region32: #{textrcnn_forward.1} parent=1 // pred_region
      _
    $region33: #{textrcnn_forward.1} parent=1 // pred_fallthru
      _
    // Predicated region
    $region34: #{textrcnn_forward.1} parent=1 // pred_check
      _
    $region35: #{textrcnn_forward.1} parent=1 // pred_check_branch
      %43 = sbr.rel (0) target = $region37
    $region36: #{textrcnn_forward.1} parent=1 // pred_region
      _
    $region37: #{textrcnn_forward.1} parent=1 // pred_fallthru
      _
    // Predicated region
    $region38: #{textrcnn_forward.1} parent=1 // pred_check
      _
    $region39: #{textrcnn_forward.1} parent=1 // pred_check_branch
      %45 = sbr.rel (0) target = $region41
    $region40: #{textrcnn_forward.1} parent=1 // pred_region
      %46 = dma.done [#allocation3], 2048
    $region41: #{textrcnn_forward.1} parent=1 // pred_fallthru
      _
    %v47 = vlaneseq
    %v48 = vand.u32 %v47, 127
    %v49 = vld [vmem:[%s0] sm:$0xff]
    %v50 = vld [vmem:[%s0 + $0x8] sm:$0xff]
    %v51 = vld [vmem:[%s0 + $0x10] sm:$0xff]
    %v52 = vld [vmem:[%s0 + $0x18] sm:$0xff]
    %v53 = vld [vmem:[%s0 + $0x20] sm:$0xff]
    %v54 = vld [vmem:[%s0 + $0x28] sm:$0xff]
    %v55 = vld [vmem:[%s0 + $0x30] sm:$0xff]
    %v56 = vld [vmem:[%s0 + $0x38] sm:$0xff]
    %57 = vset.pattern.permute.xlu0 0
    %58 = vperm.xlu0 %57, %v49
    %v59 = vpop.permute.xlu0 %58
    %60 = vset.pattern.permute.xlu0 0
    %61 = vperm.xlu0 %60, %v50
    %v62 = vpop.permute.xlu0 %61
    %63 = vset.pattern.permute.xlu0 0
    %64 = vperm.xlu0 %63, %v51
    %v65 = vpop.permute.xlu0 %64
    %66 = vset.pattern.permute.xlu0 0
    %67 = vperm.xlu0 %66, %v52
    %v68 = vpop.permute.xlu0 %67
    %69 = vset.pattern.permute.xlu0 0
    %70 = vperm.xlu0 %69, %v53
    %v71 = vpop.permute.xlu0 %70
    %72 = vset.pattern.permute.xlu0 0
    %73 = vperm.xlu0 %72, %v54
    %v74 = vpop.permute.xlu0 %73
    %75 = vset.pattern.permute.xlu0 0
    %76 = vperm.xlu0 %75, %v55
    %v77 = vpop.permute.xlu0 %76
    %78 = vset.pattern.permute.xlu0 0
    %79 = vperm.xlu0 %78, %v56
    %v80 = vpop.permute.xlu0 %79
    %vm81 = vcmp.eq.s32.totalorder %v48, %v59
    %vm82 = vcmp.eq.s32.totalorder %v48, %v62
    %vm83 = vcmp.eq.s32.totalorder %v48, %v65
    %vm84 = vcmp.eq.s32.totalorder %v48, %v68
    %vm85 = vcmp.eq.s32.totalorder %v48, %v71
    %vm86 = vcmp.eq.s32.totalorder %v48, %v74
    %vm87 = vcmp.eq.s32.totalorder %v48, %v77
    %vm88 = vcmp.eq.s32.totalorder %v48, %v80
    %v89 = vsel %vm81, 1, 0
    %v90 = vsel %vm82, 1, 0
    %v91 = vsel %vm83, 1, 0
    %v92 = vsel %vm84, 1, 0
    %v93 = vsel %vm85, 1, 0
    %v94 = vsel %vm86, 1, 0
    %v95 = vsel %vm87, 1, 0
    %v96 = vsel %vm88, 1, 0
    %v97 = vcvt.s32.f32 %v89
    %v98 = vcvt.s32.f32 %v90
    %v99 = vcvt.s32.f32 %v91
    %v100 = vcvt.s32.f32 %v92
    %v101 = vcvt.s32.f32 %v93
    %v102 = vcvt.s32.f32 %v94
    %v103 = vcvt.s32.f32 %v95
    %v104 = vcvt.s32.f32 %v96
    %v105 = vld [vmem:[%s1] sm:$0xff]
    %v106 = vld [vmem:[%s1 + $0x8] sm:$0xff]
    %v107 = vld [vmem:[%s1 + $0x10] sm:$0xff]
    %v108 = vld [vmem:[%s1 + $0x18] sm:$0xff]
    %v109 = vld [vmem:[%s1 + $0x20] sm:$0xff]
    %v110 = vld [vmem:[%s1 + $0x28] sm:$0xff]
    %v111 = vld [vmem:[%s1 + $0x30] sm:$0xff]
    %v112 = vld [vmem:[%s1 + $0x38] sm:$0xff]
    %113 = vset.pattern.permute.xlu0 0
    %114 = vperm.xlu0 %113, %v105
    %v115 = vpop.permute.xlu0 %114
    %116 = vset.pattern.permute.xlu0 0
    %117 = vperm.xlu0 %116, %v106
    %v118 = vpop.permute.xlu0 %117
    %119 = vset.pattern.permute.xlu0 0
    %120 = vperm.xlu0 %119, %v107
    %v121 = vpop.permute.xlu0 %120
    %122 = vset.pattern.permute.xlu0 0
    %123 = vperm.xlu0 %122, %v108
    %v124 = vpop.permute.xlu0 %123
    %125 = vset.pattern.permute.xlu0 0
    %126 = vperm.xlu0 %125, %v109
    %v127 = vpop.permute.xlu0 %126
    %128 = vset.pattern.permute.xlu0 0
    %129 = vperm.xlu0 %128, %v110
    %v130 = vpop.permute.xlu0 %129
    %131 = vset.pattern.permute.xlu0 0
    %132 = vperm.xlu0 %131, %v111
    %v133 = vpop.permute.xlu0 %132
    %134 = vset.pattern.permute.xlu0 0
    %135 = vperm.xlu0 %134, %v112
    %v136 = vpop.permute.xlu0 %135
    %vm137 = vcmp.eq.s32.totalorder %v48, %v115
    %vm138 = vcmp.eq.s32.totalorder %v48, %v118
    %vm139 = vcmp.eq.s32.totalorder %v48, %v121
    %vm140 = vcmp.eq.s32.totalorder %v48, %v124
    %vm141 = vcmp.eq.s32.totalorder %v48, %v127
    %vm142 = vcmp.eq.s32.totalorder %v48, %v130
    %vm143 = vcmp.eq.s32.totalorder %v48, %v133
    %vm144 = vcmp.eq.s32.totalorder %v48, %v136
    %v145 = vsel %vm137, 1, 0
    %v146 = vsel %vm138, 1, 0
    %v147 = vsel %vm139, 1, 0
    %v148 = vsel %vm140, 1, 0
    %v149 = vsel %vm141, 1, 0
    %v150 = vsel %vm142, 1, 0
    %v151 = vsel %vm143, 1, 0
    %v152 = vsel %vm144, 1, 0
    %v153 = vcvt.s32.f32 %v145
    %v154 = vcvt.s32.f32 %v146
    %v155 = vcvt.s32.f32 %v147
    %v156 = vcvt.s32.f32 %v148
    %v157 = vcvt.s32.f32 %v149
    %v158 = vcvt.s32.f32 %v150
    %v159 = vcvt.s32.f32 %v151
    %v160 = vcvt.s32.f32 %v152
    %v161 = vld [vmem:[%s2] sm:$0xff]
    %v162 = vld [vmem:[%s2 + $0x8] sm:$0xff]
    %v163 = vld [vmem:[%s2 + $0x10] sm:$0xff]
    %v164 = vld [vmem:[%s2 + $0x18] sm:$0xff]
    %v165 = vld [vmem:[%s2 + $0x20] sm:$0xff]
    %v166 = vld [vmem:[%s2 + $0x28] sm:$0xff]
    %v167 = vld [vmem:[%s2 + $0x30] sm:$0xff]
    %v168 = vld [vmem:[%s2 + $0x38] sm:$0xff]
    %v169 = vld [vmem:[%s2 + $0x40] sm:$0xff]
    %v170 = vld [vmem:[%s2 + $0x48] sm:$0xff]
    %v171 = vld [vmem:[%s2 + $0x50] sm:$0xff]
    %v172 = vld [vmem:[%s2 + $0x58] sm:$0xff]
    %v173 = vld [vmem:[%s2 + $0x60] sm:$0xff]
    %v174 = vld [vmem:[%s2 + $0x68] sm:$0xff]
    %v175 = vld [vmem:[%s2 + $0x70] sm:$0xff]
    %v176 = vld [vmem:[%s2 + $0x78] sm:$0xff]
    %v177 = vld [vmem:[#allocation2] sm:$0xff]
    %v178 = vld [vmem:[#allocation2 + $0x8] sm:$0xff]
    %v179 = vld [vmem:[#allocation2 + $0x10] sm:$0xff]
    %v180 = vld [vmem:[#allocation2 + $0x18] sm:$0xff]
    %v181 = vld [vmem:[#allocation2 + $0x20] sm:$0xff]
    %v182 = vld [vmem:[#allocation2 + $0x28] sm:$0xff]
    %v183 = vld [vmem:[#allocation2 + $0x30] sm:$0xff]
    %v184 = vld [vmem:[#allocation2 + $0x38] sm:$0xff]
    %v185 = vld [vmem:[#allocation2 + $0x40] sm:$0xff]
    %v186 = vld [vmem:[#allocation2 + $0x48] sm:$0xff]
    %v187 = vld [vmem:[#allocation2 + $0x50] sm:$0xff]
    %v188 = vld [vmem:[#allocation2 + $0x58] sm:$0xff]
    %v189 = vld [vmem:[#allocation2 + $0x60] sm:$0xff]
    %v190 = vld [vmem:[#allocation2 + $0x68] sm:$0xff]
    %v191 = vld [vmem:[#allocation2 + $0x70] sm:$0xff]
    %v192 = vld [vmem:[#allocation2 + $0x78] sm:$0xff]
    %vm193 = vcmask 523264
    %v195 = vsel %vm193, %v153, 0
    %v198 = vsel %vm193, %v154, 0
    %v201 = vsel %vm193, %v155, 0
    %v204 = vsel %vm193, %v156, 0
    %v207 = vsel %vm193, %v157, 0
    %v210 = vsel %vm193, %v158, 0
    %v213 = vsel %vm193, %v159, 0
    %v216 = vsel %vm193, %v160, 0
    %218 = vmatprep.subr.mxu0 0.0
    %219 = vmatpush1.msra.mxu0 0.0
    %220 = vmatprep.subr.mxu0 0.0
    %221 = vmatpush1.msra.mxu0 0.0
    %222 = vmatprep.subr.mxu0 0.0
    %223 = vmatpush1.msra.mxu0 0.0
    %224 = vmatprep.subr.mxu0 0.0
    %225 = vmatpush1.msra.mxu0 0.0
    %226 = vmatprep.subr.mxu0 0.0
    %227 = vmatpush1.msra.mxu0 0.0
    %228 = vmatprep.subr.mxu0 0.0
    %229 = vmatpush1.msra.mxu0 0.0
    %230 = vmatprep.subr.mxu0 0.0
    %231 = vmatpush1.msra.mxu0 0.0
    %232 = vmatprep.subr.mxu0 0.0
    %233 = vmatpush1.msra.mxu0 0.0
    %234 = vmatprep.subr.mxu0 %v192
    %235 = vmatpush1.msra.mxu0 %v191
    %236 = vmatprep.subr.mxu0 %v190
    %237 = vmatpush1.msra.mxu0 %v189
    %238 = vmatprep.subr.mxu0 %v188
    %239 = vmatpush1.msra.mxu0 %v187
    %240 = vmatprep.subr.mxu0 %v186
    %241 = vmatpush1.msra.mxu0 %v185
    %242 = vmatprep.subr.mxu0 %v184
    %243 = vmatpush1.msra.mxu0 %v183
    %244 = vmatprep.subr.mxu0 %v182
    %245 = vmatpush1.msra.mxu0 %v181
    %246 = vmatprep.subr.mxu0 %v180
    %247 = vmatpush1.msra.mxu0 %v179
    %248 = vmatprep.subr.mxu0 %v178
    %249 = vmatpush1.msra.mxu0 %v177
    %250 = vmatprep.subr.mxu0 0.0
    %251 = vmatpush2.msra.mxu0 0.0
    %252 = vmatprep.subr.mxu0 0.0
    %253 = vmatpush2.msra.mxu0 0.0
    %254 = vmatprep.subr.mxu0 0.0
    %255 = vmatpush2.msra.mxu0 0.0
    %256 = vmatprep.subr.mxu0 0.0
    %257 = vmatpush2.msra.mxu0 0.0
    %258 = vmatprep.subr.mxu0 0.0
    %259 = vmatpush2.msra.mxu0 0.0
    %260 = vmatprep.subr.mxu0 0.0
    %261 = vmatpush2.msra.mxu0 0.0
    %262 = vmatprep.subr.mxu0 0.0
    %263 = vmatpush2.msra.mxu0 0.0
    %264 = vmatprep.subr.mxu0 0.0
    %265 = vmatpush2.msra.mxu0 0.0
    %266 = vmatprep.subr.mxu0 0.0
    %267 = vmatpush2.msra.mxu0 0.0
    %268 = vmatprep.subr.mxu0 0.0
    %269 = vmatpush2.msra.mxu0 0.0
    %270 = vmatprep.subr.mxu0 0.0
    %271 = vmatpush2.msra.mxu0 0.0
    %272 = vmatprep.subr.mxu0 0.0
    %273 = vmatpush2.msra.mxu0 0.0
    %274 = vmatprep.subr.mxu0 0.0
    %275 = vmatpush2.msra.mxu0 0.0
    %276 = vmatprep.subr.mxu0 0.0
    %277 = vmatpush2.msra.mxu0 0.0
    %278 = vmatprep.subr.mxu0 0.0
    %279 = vmatpush2.msra.mxu0 0.0
    %280 = vmatprep.subr.mxu0 0.0
    %281 = vmatpush2.msra.mxu0 0.0
    %282 = vmatprep.mubr.f32.mxu0 0.0
    %283 = vmatmul.mubr.f32.gmra.mxu0 %v195
    %v284 = vpop.f32.mrf.mxu0
    %v285 = vadd.f32 0.0, %v284
    %v286 = vpop.f32.mrf.mxu0
    %v287 = vadd.f32 0.0, %v286
    %288 = vmatprep.mubr.f32.mxu0 0.0
    %289 = vmatmul.mubr.f32.gmra.mxu0 %v198
    %v290 = vpop.f32.mrf.mxu0
    %v291 = vadd.f32 0.0, %v290
    %v292 = vpop.f32.mrf.mxu0
    %v293 = vadd.f32 0.0, %v292
    %294 = vmatprep.mubr.f32.mxu0 0.0
    %295 = vmatmul.mubr.f32.gmra.mxu0 %v201
    %v296 = vpop.f32.mrf.mxu0
    %v297 = vadd.f32 0.0, %v296
    %v298 = vpop.f32.mrf.mxu0
    %v299 = vadd.f32 0.0, %v298
    %300 = vmatprep.mubr.f32.mxu0 0.0
    %301 = vmatmul.mubr.f32.gmra.mxu0 %v204
    %v302 = vpop.f32.mrf.mxu0
    %v303 = vadd.f32 0.0, %v302
    %v304 = vpop.f32.mrf.mxu0
    %v305 = vadd.f32 0.0, %v304
    %306 = vmatprep.mubr.f32.mxu0 0.0
    %307 = vmatmul.mubr.f32.gmra.mxu0 %v207
    %v308 = vpop.f32.mrf.mxu0
    %v309 = vadd.f32 0.0, %v308
    %v310 = vpop.f32.mrf.mxu0
    %v311 = vadd.f32 0.0, %v310
    %312 = vmatprep.mubr.f32.mxu0 0.0
    %313 = vmatmul.mubr.f32.gmra.mxu0 %v210
    %v314 = vpop.f32.mrf.mxu0
    %v315 = vadd.f32 0.0, %v314
    %v316 = vpop.f32.mrf.mxu0
    %v317 = vadd.f32 0.0, %v316
    %318 = vmatprep.mubr.f32.mxu0 0.0
    %319 = vmatmul.mubr.f32.gmra.mxu0 %v213
    %v320 = vpop.f32.mrf.mxu0
    %v321 = vadd.f32 0.0, %v320
    %v322 = vpop.f32.mrf.mxu0
    %v323 = vadd.f32 0.0, %v322
    %324 = vmatprep.mubr.f32.mxu0 0.0
    %325 = vmatmul.mubr.f32.gmra.mxu0 %v216
    %v326 = vpop.f32.mrf.mxu0
    %v327 = vadd.f32 0.0, %v326
    %v328 = vpop.f32.mrf.mxu0
    %v329 = vadd.f32 0.0, %v328
    %330 = vdwg.mxu0
    %v332 = vsel %vm193, %v97, 0
    %v335 = vsel %vm193, %v98, 0
    %v338 = vsel %vm193, %v99, 0
    %v341 = vsel %vm193, %v100, 0
    %v344 = vsel %vm193, %v101, 0
    %v347 = vsel %vm193, %v102, 0
    %v350 = vsel %vm193, %v103, 0
    %v353 = vsel %vm193, %v104, 0
    %355 = vmatprep.subr.mxu0 0.0
    %356 = vmatpush1.msra.mxu0 0.0
    %357 = vmatprep.subr.mxu0 0.0
    %358 = vmatpush1.msra.mxu0 0.0
    %359 = vmatprep.subr.mxu0 0.0
    %360 = vmatpush1.msra.mxu0 0.0
    %361 = vmatprep.subr.mxu0 0.0
    %362 = vmatpush1.msra.mxu0 0.0
    %363 = vmatprep.subr.mxu0 0.0
    %364 = vmatpush1.msra.mxu0 0.0
    %365 = vmatprep.subr.mxu0 0.0
    %366 = vmatpush1.msra.mxu0 0.0
    %367 = vmatprep.subr.mxu0 0.0
    %368 = vmatpush1.msra.mxu0 0.0
    %369 = vmatprep.subr.mxu0 0.0
    %370 = vmatpush1.msra.mxu0 0.0
    %371 = vmatprep.subr.mxu0 %v176
    %372 = vmatpush1.msra.mxu0 %v175
    %373 = vmatprep.subr.mxu0 %v174
    %374 = vmatpush1.msra.mxu0 %v173
    %375 = vmatprep.subr.mxu0 %v172
    %376 = vmatpush1.msra.mxu0 %v171
    %377 = vmatprep.subr.mxu0 %v170
    %378 = vmatpush1.msra.mxu0 %v169
    %379 = vmatprep.subr.mxu0 %v168
    %380 = vmatpush1.msra.mxu0 %v167
    %381 = vmatprep.subr.mxu0 %v166
    %382 = vmatpush1.msra.mxu0 %v165
    %383 = vmatprep.subr.mxu0 %v164
    %384 = vmatpush1.msra.mxu0 %v163
    %385 = vmatprep.subr.mxu0 %v162
    %386 = vmatpush1.msra.mxu0 %v161
    %387 = vmatprep.subr.mxu0 0.0
    %388 = vmatpush2.msra.mxu0 0.0
    %389 = vmatprep.subr.mxu0 0.0
    %390 = vmatpush2.msra.mxu0 0.0
    %391 = vmatprep.subr.mxu0 0.0
    %392 = vmatpush2.msra.mxu0 0.0
    %393 = vmatprep.subr.mxu0 0.0
    %394 = vmatpush2.msra.mxu0 0.0
    %395 = vmatprep.subr.mxu0 0.0
    %396 = vmatpush2.msra.mxu0 0.0
    %397 = vmatprep.subr.mxu0 0.0
    %398 = vmatpush2.msra.mxu0 0.0
    %399 = vmatprep.subr.mxu0 0.0
    %400 = vmatpush2.msra.mxu0 0.0
    %401 = vmatprep.subr.mxu0 0.0
    %402 = vmatpush2.msra.mxu0 0.0
    %403 = vmatprep.subr.mxu0 0.0
    %404 = vmatpush2.msra.mxu0 0.0
    %405 = vmatprep.subr.mxu0 0.0
    %406 = vmatpush2.msra.mxu0 0.0
    %407 = vmatprep.subr.mxu0 0.0
    %408 = vmatpush2.msra.mxu0 0.0
    %409 = vmatprep.subr.mxu0 0.0
    %410 = vmatpush2.msra.mxu0 0.0
    %411 = vmatprep.subr.mxu0 0.0
    %412 = vmatpush2.msra.mxu0 0.0
    %413 = vmatprep.subr.mxu0 0.0
    %414 = vmatpush2.msra.mxu0 0.0
    %415 = vmatprep.subr.mxu0 0.0
    %416 = vmatpush2.msra.mxu0 0.0
    %417 = vmatprep.subr.mxu0 0.0
    %418 = vmatpush2.msra.mxu0 0.0
    %419 = vmatprep.mubr.f32.mxu0 0.0
    %420 = vmatmul.mubr.f32.gmra.mxu0 %v332
    %v421 = vpop.f32.mrf.mxu0
    %v422 = vadd.f32 %v285, %v421
    %v423 = vpop.f32.mrf.mxu0
    %v424 = vadd.f32 %v287, %v423
    %425 = vmatprep.mubr.f32.mxu0 0.0
    %426 = vmatmul.mubr.f32.gmra.mxu0 %v335
    %v427 = vpop.f32.mrf.mxu0
    %v428 = vadd.f32 %v291, %v427
    %v429 = vpop.f32.mrf.mxu0
    %v430 = vadd.f32 %v293, %v429
    %431 = vmatprep.mubr.f32.mxu0 0.0
    %432 = vmatmul.mubr.f32.gmra.mxu0 %v338
    %v433 = vpop.f32.mrf.mxu0
    %v434 = vadd.f32 %v297, %v433
    %v435 = vpop.f32.mrf.mxu0
    %v436 = vadd.f32 %v299, %v435
    %437 = vmatprep.mubr.f32.mxu0 0.0
    %438 = vmatmul.mubr.f32.gmra.mxu0 %v341
    %v439 = vpop.f32.mrf.mxu0
    %v440 = vadd.f32 %v303, %v439
    %v441 = vpop.f32.mrf.mxu0
    %v442 = vadd.f32 %v305, %v441
    %443 = vmatprep.mubr.f32.mxu0 0.0
    %444 = vmatmul.mubr.f32.gmra.mxu0 %v344
    %v445 = vpop.f32.mrf.mxu0
    %v446 = vadd.f32 %v309, %v445
    %v447 = vpop.f32.mrf.mxu0
    %v448 = vadd.f32 %v311, %v447
    %449 = vmatprep.mubr.f32.mxu0 0.0
    %450 = vmatmul.mubr.f32.gmra.mxu0 %v347
    %v451 = vpop.f32.mrf.mxu0
    %v452 = vadd.f32 %v315, %v451
    %v453 = vpop.f32.mrf.mxu0
    %v454 = vadd.f32 %v317, %v453
    %455 = vmatprep.mubr.f32.mxu0 0.0
    %456 = vmatmul.mubr.f32.gmra.mxu0 %v350
    %v457 = vpop.f32.mrf.mxu0
    %v458 = vadd.f32 %v321, %v457
    %v459 = vpop.f32.mrf.mxu0
    %v460 = vadd.f32 %v323, %v459
    %461 = vmatprep.mubr.f32.mxu0 0.0
    %462 = vmatmul.mubr.f32.gmra.mxu0 %v353
    %v463 = vpop.f32.mrf.mxu0
    %v464 = vadd.f32 %v327, %v463
    %v465 = vpop.f32.mrf.mxu0
    %v466 = vadd.f32 %v329, %v465
    %467 = vdwg.mxu0
    %v468 = vld [vmem:[%s4] sm:$0xff]
    %v469 = vld [vmem:[%s4 + $0x8] sm:$0xff]
    %v470 = vld [vmem:[%s4 + $0x10] sm:$0xff]
    %v471 = vld [vmem:[%s4 + $0x18] sm:$0xff]
    %v472 = vld [vmem:[%s4 + $0x20] sm:$0xff]
    %v473 = vld [vmem:[%s4 + $0x28] sm:$0xff]
    %v474 = vld [vmem:[%s4 + $0x30] sm:$0xff]
    %v475 = vld [vmem:[%s4 + $0x38] sm:$0xff]
    %476 = vmatprep.subr.mxu0 0.0
    %477 = vmatpush1.msra.mxu0 0.0
    %478 = vmatprep.subr.mxu0 0.0
    %479 = vmatpush1.msra.mxu0 0.0
    %480 = vmatprep.subr.mxu0 0.0
    %481 = vmatpush1.msra.mxu0 0.0
    %482 = vmatprep.subr.mxu0 0.0
    %483 = vmatpush1.msra.mxu0 0.0
    %484 = vmatprep.subr.mxu0 0.0
    %485 = vmatpush1.msra.mxu0 0.0
    %486 = vmatprep.subr.mxu0 0.0
    %487 = vmatpush1.msra.mxu0 0.0
    %488 = vmatprep.subr.mxu0 0.0
    %489 = vmatpush1.msra.mxu0 0.0
    %490 = vmatprep.subr.mxu0 0.0
    %491 = vmatpush1.msra.mxu0 0.0
    %492 = vmatprep.subr.mxu0 0.0
    %493 = vmatpush1.msra.mxu0 %v475
    %494 = vmatprep.subr.mxu0 0.0
    %495 = vmatpush1.msra.mxu0 %v474
    %496 = vmatprep.subr.mxu0 0.0
    %497 = vmatpush1.msra.mxu0 %v473
    %498 = vmatprep.subr.mxu0 0.0
    %499 = vmatpush1.msra.mxu0 %v472
    %500 = vmatprep.subr.mxu0 0.0
    %501 = vmatpush1.msra.mxu0 %v471
    %502 = vmatprep.subr.mxu0 0.0
    %503 = vmatpush1.msra.mxu0 %v470
    %504 = vmatprep.subr.mxu0 0.0
    %505 = vmatpush1.msra.mxu0 %v469
    %506 = vmatprep.subr.mxu0 0.0
    %507 = vmatpush1.msra.mxu0 %v468
    %508 = vmatprep.subr.mxu0 0.0
    %509 = vmatpush2.msra.mxu0 0.0
    %510 = vmatprep.subr.mxu0 0.0
    %511 = vmatpush2.msra.mxu0 0.0
    %512 = vmatprep.subr.mxu0 0.0
    %513 = vmatpush2.msra.mxu0 0.0
    %514 = vmatprep.subr.mxu0 0.0
    %515 = vmatpush2.msra.mxu0 0.0
    %516 = vmatprep.subr.mxu0 0.0
    %517 = vmatpush2.msra.mxu0 0.0
    %518 = vmatprep.subr.mxu0 0.0
    %519 = vmatpush2.msra.mxu0 0.0
    %520 = vmatprep.subr.mxu0 0.0
    %521 = vmatpush2.msra.mxu0 0.0
    %522 = vmatprep.subr.mxu0 0.0
    %523 = vmatpush2.msra.mxu0 0.0
    %524 = vmatprep.subr.mxu0 0.0
    %525 = vmatpush2.msra.mxu0 0.0
    %526 = vmatprep.subr.mxu0 0.0
    %527 = vmatpush2.msra.mxu0 0.0
    %528 = vmatprep.subr.mxu0 0.0
    %529 = vmatpush2.msra.mxu0 0.0
    %530 = vmatprep.subr.mxu0 0.0
    %531 = vmatpush2.msra.mxu0 0.0
    %532 = vmatprep.subr.mxu0 0.0
    %533 = vmatpush2.msra.mxu0 0.0
    %534 = vmatprep.subr.mxu0 0.0
    %535 = vmatpush2.msra.mxu0 0.0
    %536 = vmatprep.subr.mxu0 0.0
    %537 = vmatpush2.msra.mxu0 0.0
    %538 = vmatprep.subr.mxu0 0.0
    %539 = vmatpush2.msra.mxu0 0.0
    %540 = vmatprep.mubr.f32.mxu0 0.0
    %541 = vmatmul.mubr.f32.gmra.mxu0 %v332
    %v542 = vpop.f32.mrf.mxu0
    %v543 = vadd.f32 0.0, %v542
    %v544 = vpop.f32.mrf.mxu0
    %545 = vmatprep.mubr.f32.mxu0 0.0
    %546 = vmatmul.mubr.f32.gmra.mxu0 %v335
    %v547 = vpop.f32.mrf.mxu0
    %v548 = vadd.f32 0.0, %v547
    %v549 = vpop.f32.mrf.mxu0
    %550 = vmatprep.mubr.f32.mxu0 0.0
    %551 = vmatmul.mubr.f32.gmra.mxu0 %v338
    %v552 = vpop.f32.mrf.mxu0
    %v553 = vadd.f32 0.0, %v552
    %v554 = vpop.f32.mrf.mxu0
    %555 = vmatprep.mubr.f32.mxu0 0.0
    %556 = vmatmul.mubr.f32.gmra.mxu0 %v341
    %v557 = vpop.f32.mrf.mxu0
    %v558 = vadd.f32 0.0, %v557
    %v559 = vpop.f32.mrf.mxu0
    %560 = vmatprep.mubr.f32.mxu0 0.0
    %561 = vmatmul.mubr.f32.gmra.mxu0 %v344
    %v562 = vpop.f32.mrf.mxu0
    %v563 = vadd.f32 0.0, %v562
    %v564 = vpop.f32.mrf.mxu0
    %565 = vmatprep.mubr.f32.mxu0 0.0
    %566 = vmatmul.mubr.f32.gmra.mxu0 %v347
    %v567 = vpop.f32.mrf.mxu0
    %v568 = vadd.f32 0.0, %v567
    %v569 = vpop.f32.mrf.mxu0
    %570 = vmatprep.mubr.f32.mxu0 0.0
    %571 = vmatmul.mubr.f32.gmra.mxu0 %v350
    %v572 = vpop.f32.mrf.mxu0
    %v573 = vadd.f32 0.0, %v572
    %v574 = vpop.f32.mrf.mxu0
    %575 = vmatprep.mubr.f32.mxu0 0.0
    %576 = vmatmul.mubr.f32.gmra.mxu0 %v353
    %v577 = vpop.f32.mrf.mxu0
    %v578 = vadd.f32 0.0, %v577
    %v579 = vpop.f32.mrf.mxu0
    %580 = vdwg.mxu0
    %v581 = vmax.f32 %v543, %v548
    %v582 = vmax.f32 %v581, %v553
    %v583 = vmax.f32 %v582, %v558
    %v584 = vmax.f32 %v583, %v563
    %v585 = vmax.f32 %v584, %v568
    %v586 = vmax.f32 %v585, %v573
    %v587 = vmax.f32 %v586, %v578
    %v588 = vmax.f32 %v587, 0.0
    %v589 = vld [vmem:[%s5] sm:$0xff]
    %v590 = vld [vmem:[%s5 + $0x8] sm:$0xff]
    %v591 = vld [vmem:[%s5 + $0x10] sm:$0xff]
    %v592 = vld [vmem:[%s5 + $0x18] sm:$0xff]
    %v593 = vld [vmem:[%s5 + $0x20] sm:$0xff]
    %v594 = vld [vmem:[%s5 + $0x28] sm:$0xff]
    %v595 = vld [vmem:[%s5 + $0x30] sm:$0xff]
    %v596 = vld [vmem:[%s5 + $0x38] sm:$0xff]
    %v597 = vld [vmem:[%s5 + $0x40] sm:$0xff]
    %v598 = vld [vmem:[%s5 + $0x48] sm:$0xff]
    %v599 = vld [vmem:[%s5 + $0x50] sm:$0xff]
    %v600 = vld [vmem:[%s5 + $0x58] sm:$0xff]
    %v601 = vld [vmem:[%s5 + $0x60] sm:$0xff]
    %v602 = vld [vmem:[%s5 + $0x68] sm:$0xff]
    %v603 = vld [vmem:[%s5 + $0x70] sm:$0xff]
    %v604 = vld [vmem:[%s5 + $0x78] sm:$0xff]
    %v605 = vld [vmem:[%s5 + $0x80] sm:$0xff]
    %v606 = vld [vmem:[%s5 + $0x88] sm:$0xff]
    %v607 = vld [vmem:[%s5 + $0x90] sm:$0xff]
    %v608 = vld [vmem:[%s5 + $0x98] sm:$0xff]
    %v609 = vld [vmem:[%s5 + $0xa0] sm:$0xff]
    %v610 = vld [vmem:[%s5 + $0xa8] sm:$0xff]
    %v611 = vld [vmem:[%s5 + $0xb0] sm:$0xff]
    %v612 = vld [vmem:[%s5 + $0xb8] sm:$0xff]
    %v613 = vld [vmem:[%s5 + $0xc0] sm:$0xff]
    %v614 = vld [vmem:[%s5 + $0xc8] sm:$0xff]
    %v615 = vld [vmem:[%s5 + $0xd0] sm:$0xff]
    %v616 = vld [vmem:[%s5 + $0xd8] sm:$0xff]
    %v617 = vld [vmem:[%s5 + $0xe0] sm:$0xff]
    %v618 = vld [vmem:[%s5 + $0xe8] sm:$0xff]
    %v619 = vld [vmem:[%s5 + $0xf0] sm:$0xff]
    %v620 = vld [vmem:[%s5 + $0xf8] sm:$0xff]
    %vm621 = vcmp.lt.s32.totalorder %v48, 64
    %622 = vmatprep.subr.mxu0 %v620
    %623 = vmatpush1.msra.mxu0 %v619
    %624 = vmatprep.subr.mxu0 %v618
    %625 = vmatpush1.msra.mxu0 %v617
    %626 = vmatprep.subr.mxu0 %v616
    %627 = vmatpush1.msra.mxu0 %v615
    %628 = vmatprep.subr.mxu0 %v614
    %629 = vmatpush1.msra.mxu0 %v613
    %630 = vmatprep.subr.mxu0 %v612
    %631 = vmatpush1.msra.mxu0 %v611
    %632 = vmatprep.subr.mxu0 %v610
    %633 = vmatpush1.msra.mxu0 %v609
    %634 = vmatprep.subr.mxu0 %v608
    %635 = vmatpush1.msra.mxu0 %v607
    %636 = vmatprep.subr.mxu0 %v606
    %637 = vmatpush1.msra.mxu0 %v605
    %638 = vmatprep.subr.mxu0 %v604
    %639 = vmatpush1.msra.mxu0 %v603
    %640 = vmatprep.subr.mxu0 %v602
    %641 = vmatpush1.msra.mxu0 %v601
    %642 = vmatprep.subr.mxu0 %v600
    %643 = vmatpush1.msra.mxu0 %v599
    %644 = vmatprep.subr.mxu0 %v598
    %645 = vmatpush1.msra.mxu0 %v597
    %646 = vmatprep.subr.mxu0 %v596
    %647 = vmatpush1.msra.mxu0 %v595
    %648 = vmatprep.subr.mxu0 %v594
    %649 = vmatpush1.msra.mxu0 %v593
    %650 = vmatprep.subr.mxu0 %v592
    %651 = vmatpush1.msra.mxu0 %v591
    %652 = vmatprep.subr.mxu0 %v590
    %653 = vmatpush1.msra.mxu0 %v589
    %654 = vmatprep.subr.mxu0 0.0
    %655 = vmatpush2.msra.mxu0 0.0
    %656 = vmatprep.subr.mxu0 0.0
    %657 = vmatpush2.msra.mxu0 0.0
    %658 = vmatprep.subr.mxu0 0.0
    %659 = vmatpush2.msra.mxu0 0.0
    %660 = vmatprep.subr.mxu0 0.0
    %661 = vmatpush2.msra.mxu0 0.0
    %662 = vmatprep.subr.mxu0 0.0
    %663 = vmatpush2.msra.mxu0 0.0
    %664 = vmatprep.subr.mxu0 0.0
    %665 = vmatpush2.msra.mxu0 0.0
    %666 = vmatprep.subr.mxu0 0.0
    %667 = vmatpush2.msra.mxu0 0.0
    %668 = vmatprep.subr.mxu0 0.0
    %669 = vmatpush2.msra.mxu0 0.0
    %670 = vmatprep.subr.mxu0 0.0
    %671 = vmatpush2.msra.mxu0 0.0
    %672 = vmatprep.subr.mxu0 0.0
    %673 = vmatpush2.msra.mxu0 0.0
    %674 = vmatprep.subr.mxu0 0.0
    %675 = vmatpush2.msra.mxu0 0.0
    %676 = vmatprep.subr.mxu0 0.0
    %677 = vmatpush2.msra.mxu0 0.0
    %678 = vmatprep.subr.mxu0 0.0
    %679 = vmatpush2.msra.mxu0 0.0
    %680 = vmatprep.subr.mxu0 0.0
    %681 = vmatpush2.msra.mxu0 0.0
    %682 = vmatprep.subr.mxu0 0.0
    %683 = vmatpush2.msra.mxu0 0.0
    %684 = vmatprep.subr.mxu0 0.0
    %685 = vmatpush2.msra.mxu0 0.0
    %686 = vmatprep.mubr.f32.mxu0 0.0
    %687 = vmatmul.mubr.f32.gmra.mxu0 0.0
    %v688 = vpop.f32.mrf.mxu0
    %v689 = vadd.f32 0.0, %v688
    %v690 = vpop.f32.mrf.mxu0
    %v691 = vadd.f32 0.0, %v690
    %692 = vdwg.mxu0
    %v693 = vadd.f32 %v422, %v689
    %v694 = vadd.f32 %v424, %v691
    %v695 = vxor.u32 %v693, 2147483648
    %v696 = vmul.f32 %v695, 1.442695
    %v697 = vpow.pop %v696
    %v698 = vadd.f32 %v697, 1.0
    %v699 = vrcp.pop %v698
    %v700 = vmul.f32 1.0, %v699
    %v701 = vxor.u32 %v694, 2147483648
    %v702 = vmul.f32 %v701, 1.442695
    %v703 = vpow.pop %v702
    %v704 = vadd.f32 %v703, 1.0
    %v705 = vrcp.pop %v704
    %v706 = vmul.f32 1.0, %v705
    %v707 = vtanh.pop %v694
    %v708 = vsel %vm621, %v707, 0.0
    %v709 = vmul.f32 %v700, %v708
    %710 = vrot.lane.b32.xlu0 %v709, 64
    %v711 = vpop.permute.xlu0 %710
    %v712 = vadd.f32 %v709, %v711
    %v713 = vtanh.pop %v712
    %v714 = vmul.f32 %v706, %v713
    %v715 = vmax.f32 %v714, 0.0
    %716 = vmatprep.subr.mxu0 %v620
    %717 = vmatpush1.msra.mxu0 %v619
    %718 = vmatprep.subr.mxu0 %v618
    %719 = vmatpush1.msra.mxu0 %v617
    %720 = vmatprep.subr.mxu0 %v616
    %721 = vmatpush1.msra.mxu0 %v615
    %722 = vmatprep.subr.mxu0 %v614
    %723 = vmatpush1.msra.mxu0 %v613
    %724 = vmatprep.subr.mxu0 %v612
    %725 = vmatpush1.msra.mxu0 %v611
    %726 = vmatprep.subr.mxu0 %v610
    %727 = vmatpush1.msra.mxu0 %v609
    %728 = vmatprep.subr.mxu0 %v608
    %729 = vmatpush1.msra.mxu0 %v607
    %730 = vmatprep.subr.mxu0 %v606
    %731 = vmatpush1.msra.mxu0 %v605
    %732 = vmatprep.subr.mxu0 %v604
    %733 = vmatpush1.msra.mxu0 %v603
    %734 = vmatprep.subr.mxu0 %v602
    %735 = vmatpush1.msra.mxu0 %v601
    %736 = vmatprep.subr.mxu0 %v600
    %737 = vmatpush1.msra.mxu0 %v599
    %738 = vmatprep.subr.mxu0 %v598
    %739 = vmatpush1.msra.mxu0 %v597
    %740 = vmatprep.subr.mxu0 %v596
    %741 = vmatpush1.msra.mxu0 %v595
    %742 = vmatprep.subr.mxu0 %v594
    %743 = vmatpush1.msra.mxu0 %v593
    %744 = vmatprep.subr.mxu0 %v592
    %745 = vmatpush1.msra.mxu0 %v591
    %746 = vmatprep.subr.mxu0 %v590
    %747 = vmatpush1.msra.mxu0 %v589
    %748 = vmatprep.subr.mxu0 0.0
    %749 = vmatpush2.msra.mxu0 0.0
    %750 = vmatprep.subr.mxu0 0.0
    %751 = vmatpush2.msra.mxu0 0.0
    %752 = vmatprep.subr.mxu0 0.0
    %753 = vmatpush2.msra.mxu0 0.0
    %754 = vmatprep.subr.mxu0 0.0
    %755 = vmatpush2.msra.mxu0 0.0
    %756 = vmatprep.subr.mxu0 0.0
    %757 = vmatpush2.msra.mxu0 0.0
    %758 = vmatprep.subr.mxu0 0.0
    %759 = vmatpush2.msra.mxu0 0.0
    %760 = vmatprep.subr.mxu0 0.0
    %761 = vmatpush2.msra.mxu0 0.0
    %762 = vmatprep.subr.mxu0 0.0
    %763 = vmatpush2.msra.mxu0 0.0
    %764 = vmatprep.subr.mxu0 0.0
    %765 = vmatpush2.msra.mxu0 0.0
    %766 = vmatprep.subr.mxu0 0.0
    %767 = vmatpush2.msra.mxu0 0.0
    %768 = vmatprep.subr.mxu0 0.0
    %769 = vmatpush2.msra.mxu0 0.0
    %770 = vmatprep.subr.mxu0 0.0
    %771 = vmatpush2.msra.mxu0 0.0
    %772 = vmatprep.subr.mxu0 0.0
    %773 = vmatpush2.msra.mxu0 0.0
    %774 = vmatprep.subr.mxu0 0.0
    %775 = vmatpush2.msra.mxu0 0.0
    %776 = vmatprep.subr.mxu0 0.0
    %777 = vmatpush2.msra.mxu0 0.0
    %778 = vmatprep.subr.mxu0 0.0
    %779 = vmatpush2.msra.mxu0 0.0
    %780 = vmatprep.mubr.f32.mxu0 0.0
    %781 = vmatmul.mubr.f32.gmra.mxu0 %v714
    %v782 = vpop.f32.mrf.mxu0
    %v783 = vadd.f32 0.0, %v782
    %v784 = vpop.f32.mrf.mxu0
    %v785 = vadd.f32 0.0, %v784
    %786 = vdwg.mxu0
    %v787 = vadd.f32 %v428, %v783
    %v788 = vadd.f32 %v430, %v785
    %v789 = vxor.u32 %v787, 2147483648
    %v790 = vmul.f32 %v789, 1.442695
    %v791 = vpow.pop %v790
    %v792 = vadd.f32 %v791, 1.0
    %v793 = vrcp.pop %v792
    %v794 = vmul.f32 1.0, %v793
    %v795 = vxor.u32 %v788, 2147483648
    %v796 = vmul.f32 %v795, 1.442695
    %v797 = vpow.pop %v796
    %v798 = vadd.f32 %v797, 1.0
    %v799 = vrcp.pop %v798
    %v800 = vmul.f32 1.0, %v799
    %v801 = vtanh.pop %v788
    %v802 = vsel %vm621, %v801, %v712
    %v803 = vmul.f32 %v794, %v802
    %804 = vrot.lane.b32.xlu0 %v803, 64
    %v805 = vpop.permute.xlu0 %804
    %v806 = vadd.f32 %v803, %v805
    %v807 = vtanh.pop %v806
    %v808 = vmul.f32 %v800, %v807
    %v809 = vmax.f32 %v715, %v808
    %810 = vmatprep.subr.mxu0 %v620
    %811 = vmatpush1.msra.mxu0 %v619
    %812 = vmatprep.subr.mxu0 %v618
    %813 = vmatpush1.msra.mxu0 %v617
    %814 = vmatprep.subr.mxu0 %v616
    %815 = vmatpush1.msra.mxu0 %v615
    %816 = vmatprep.subr.mxu0 %v614
    %817 = vmatpush1.msra.mxu0 %v613
    %818 = vmatprep.subr.mxu0 %v612
    %819 = vmatpush1.msra.mxu0 %v611
    %820 = vmatprep.subr.mxu0 %v610
    %821 = vmatpush1.msra.mxu0 %v609
    %822 = vmatprep.subr.mxu0 %v608
    %823 = vmatpush1.msra.mxu0 %v607
    %824 = vmatprep.subr.mxu0 %v606
    %825 = vmatpush1.msra.mxu0 %v605
    %826 = vmatprep.subr.mxu0 %v604
    %827 = vmatpush1.msra.mxu0 %v603
    %828 = vmatprep.subr.mxu0 %v602
    %829 = vmatpush1.msra.mxu0 %v601
    %830 = vmatprep.subr.mxu0 %v600
    %831 = vmatpush1.msra.mxu0 %v599
    %832 = vmatprep.subr.mxu0 %v598
    %833 = vmatpush1.msra.mxu0 %v597
    %834 = vmatprep.subr.mxu0 %v596
    %835 = vmatpush1.msra.mxu0 %v595
    %836 = vmatprep.subr.mxu0 %v594
    %837 = vmatpush1.msra.mxu0 %v593
    %838 = vmatprep.subr.mxu0 %v592
    %839 = vmatpush1.msra.mxu0 %v591
    %840 = vmatprep.subr.mxu0 %v590
    %841 = vmatpush1.msra.mxu0 %v589
    %842 = vmatprep.subr.mxu0 0.0
    %843 = vmatpush2.msra.mxu0 0.0
    %844 = vmatprep.subr.mxu0 0.0
    %845 = vmatpush2.msra.mxu0 0.0
    %846 = vmatprep.subr.mxu0 0.0
    %847 = vmatpush2.msra.mxu0 0.0
    %848 = vmatprep.subr.mxu0 0.0
    %849 = vmatpush2.msra.mxu0 0.0
    %850 = vmatprep.subr.mxu0 0.0
    %851 = vmatpush2.msra.mxu0 0.0
    %852 = vmatprep.subr.mxu0 0.0
    %853 = vmatpush2.msra.mxu0 0.0
    %854 = vmatprep.subr.mxu0 0.0
    %855 = vmatpush2.msra.mxu0 0.0
    %856 = vmatprep.subr.mxu0 0.0
    %857 = vmatpush2.msra.mxu0 0.0
    %858 = vmatprep.subr.mxu0 0.0
    %859 = vmatpush2.msra.mxu0 0.0
    %860 = vmatprep.subr.mxu0 0.0
    %861 = vmatpush2.msra.mxu0 0.0
    %862 = vmatprep.subr.mxu0 0.0
    %863 = vmatpush2.msra.mxu0 0.0
    %864 = vmatprep.subr.mxu0 0.0
    %865 = vmatpush2.msra.mxu0 0.0
    %866 = vmatprep.subr.mxu0 0.0
    %867 = vmatpush2.msra.mxu0 0.0
    %868 = vmatprep.subr.mxu0 0.0
    %869 = vmatpush2.msra.mxu0 0.0
    %870 = vmatprep.subr.mxu0 0.0
    %871 = vmatpush2.msra.mxu0 0.0
    %872 = vmatprep.subr.mxu0 0.0
    %873 = vmatpush2.msra.mxu0 0.0
    %874 = vmatprep.mubr.f32.mxu0 0.0
    %875 = vmatmul.mubr.f32.gmra.mxu0 %v808
    %v876 = vpop.f32.mrf.mxu0
    %v877 = vadd.f32 0.0, %v876
    %v878 = vpop.f32.mrf.mxu0
    %v879 = vadd.f32 0.0, %v878
    %880 = vdwg.mxu0
    %v881 = vadd.f32 %v434, %v877
    %v882 = vadd.f32 %v436, %v879
    %v883 = vxor.u32 %v881, 2147483648
    %v884 = vmul.f32 %v883, 1.442695
    %v885 = vpow.pop %v884
    %v886 = vadd.f32 %v885, 1.0
    %v887 = vrcp.pop %v886
    %v888 = vmul.f32 1.0, %v887
    %v889 = vxor.u32 %v882, 2147483648
    %v890 = vmul.f32 %v889, 1.442695
    %v891 = vpow.pop %v890
    %v892 = vadd.f32 %v891, 1.0
    %v893 = vrcp.pop %v892
    %v894 = vmul.f32 1.0, %v893
    %v895 = vtanh.pop %v882
    %v896 = vsel %vm621, %v895, %v806
    %v897 = vmul.f32 %v888, %v896
    %898 = vrot.lane.b32.xlu0 %v897, 64
    %v899 = vpop.permute.xlu0 %898
    %v900 = vadd.f32 %v897, %v899
    %v901 = vtanh.pop %v900
    %v902 = vmul.f32 %v894, %v901
    %v903 = vmax.f32 %v809, %v902
    %904 = vmatprep.subr.mxu0 %v620
    %905 = vmatpush1.msra.mxu0 %v619
    %906 = vmatprep.subr.mxu0 %v618
    %907 = vmatpush1.msra.mxu0 %v617
    %908 = vmatprep.subr.mxu0 %v616
    %909 = vmatpush1.msra.mxu0 %v615
    %910 = vmatprep.subr.mxu0 %v614
    %911 = vmatpush1.msra.mxu0 %v613
    %912 = vmatprep.subr.mxu0 %v612
    %913 = vmatpush1.msra.mxu0 %v611
    %914 = vmatprep.subr.mxu0 %v610
    %915 = vmatpush1.msra.mxu0 %v609
    %916 = vmatprep.subr.mxu0 %v608
    %917 = vmatpush1.msra.mxu0 %v607
    %918 = vmatprep.subr.mxu0 %v606
    %919 = vmatpush1.msra.mxu0 %v605
    %920 = vmatprep.subr.mxu0 %v604
    %921 = vmatpush1.msra.mxu0 %v603
    %922 = vmatprep.subr.mxu0 %v602
    %923 = vmatpush1.msra.mxu0 %v601
    %924 = vmatprep.subr.mxu0 %v600
    %925 = vmatpush1.msra.mxu0 %v599
    %926 = vmatprep.subr.mxu0 %v598
    %927 = vmatpush1.msra.mxu0 %v597
    %928 = vmatprep.subr.mxu0 %v596
    %929 = vmatpush1.msra.mxu0 %v595
    %930 = vmatprep.subr.mxu0 %v594
    %931 = vmatpush1.msra.mxu0 %v593
    %932 = vmatprep.subr.mxu0 %v592
    %933 = vmatpush1.msra.mxu0 %v591
    %934 = vmatprep.subr.mxu0 %v590
    %935 = vmatpush1.msra.mxu0 %v589
    %936 = vmatprep.subr.mxu0 0.0
    %937 = vmatpush2.msra.mxu0 0.0
    %938 = vmatprep.subr.mxu0 0.0
    %939 = vmatpush2.msra.mxu0 0.0
    %940 = vmatprep.subr.mxu0 0.0
    %941 = vmatpush2.msra.mxu0 0.0
    %942 = vmatprep.subr.mxu0 0.0
    %943 = vmatpush2.msra.mxu0 0.0
    %944 = vmatprep.subr.mxu0 0.0
    %945 = vmatpush2.msra.mxu0 0.0
    %946 = vmatprep.subr.mxu0 0.0
    %947 = vmatpush2.msra.mxu0 0.0
    %948 = vmatprep.subr.mxu0 0.0
    %949 = vmatpush2.msra.mxu0 0.0
    %950 = vmatprep.subr.mxu0 0.0
    %951 = vmatpush2.msra.mxu0 0.0
    %952 = vmatprep.subr.mxu0 0.0
    %953 = vmatpush2.msra.mxu0 0.0
    %954 = vmatprep.subr.mxu0 0.0
    %955 = vmatpush2.msra.mxu0 0.0
    %956 = vmatprep.subr.mxu0 0.0
    %957 = vmatpush2.msra.mxu0 0.0
    %958 = vmatprep.subr.mxu0 0.0
    %959 = vmatpush2.msra.mxu0 0.0
    %960 = vmatprep.subr.mxu0 0.0
    %961 = vmatpush2.msra.mxu0 0.0
    %962 = vmatprep.subr.mxu0 0.0
    %963 = vmatpush2.msra.mxu0 0.0
    %964 = vmatprep.subr.mxu0 0.0
    %965 = vmatpush2.msra.mxu0 0.0
    %966 = vmatprep.subr.mxu0 0.0
    %967 = vmatpush2.msra.mxu0 0.0
    %968 = vmatprep.mubr.f32.mxu0 0.0
    %969 = vmatmul.mubr.f32.gmra.mxu0 %v902
    %v970 = vpop.f32.mrf.mxu0
    %v971 = vadd.f32 0.0, %v970
    %v972 = vpop.f32.mrf.mxu0
    %v973 = vadd.f32 0.0, %v972
    %974 = vdwg.mxu0
    %v975 = vadd.f32 %v440, %v971
    %v976 = vadd.f32 %v442, %v973
    %v977 = vxor.u32 %v975, 2147483648
    %v978 = vmul.f32 %v977, 1.442695
    %v979 = vpow.pop %v978
    %v980 = vadd.f32 %v979, 1.0
    %v981 = vrcp.pop %v980
    %v982 = vmul.f32 1.0, %v981
    %v983 = vxor.u32 %v976, 2147483648
    %v984 = vmul.f32 %v983, 1.442695
    %v985 = vpow.pop %v984
    %v986 = vadd.f32 %v985, 1.0
    %v987 = vrcp.pop %v986
    %v988 = vmul.f32 1.0, %v987
    %v989 = vtanh.pop %v976
    %v990 = vsel %vm621, %v989, %v900
    %v991 = vmul.f32 %v982, %v990
    %992 = vrot.lane.b32.xlu0 %v991, 64
    %v993 = vpop.permute.xlu0 %992
    %v994 = vadd.f32 %v991, %v993
    %v995 = vtanh.pop %v994
    %v996 = vmul.f32 %v988, %v995
    %v997 = vmax.f32 %v903, %v996
    %998 = vmatprep.subr.mxu0 %v620
    %999 = vmatpush1.msra.mxu0 %v619
    %1000 = vmatprep.subr.mxu0 %v618
    %1001 = vmatpush1.msra.mxu0 %v617
    %1002 = vmatprep.subr.mxu0 %v616
    %1003 = vmatpush1.msra.mxu0 %v615
    %1004 = vmatprep.subr.mxu0 %v614
    %1005 = vmatpush1.msra.mxu0 %v613
    %1006 = vmatprep.subr.mxu0 %v612
    %1007 = vmatpush1.msra.mxu0 %v611
    %1008 = vmatprep.subr.mxu0 %v610
    %1009 = vmatpush1.msra.mxu0 %v609
    %1010 = vmatprep.subr.mxu0 %v608
    %1011 = vmatpush1.msra.mxu0 %v607
    %1012 = vmatprep.subr.mxu0 %v606
    %1013 = vmatpush1.msra.mxu0 %v605
    %1014 = vmatprep.subr.mxu0 %v604
    %1015 = vmatpush1.msra.mxu0 %v603
    %1016 = vmatprep.subr.mxu0 %v602
    %1017 = vmatpush1.msra.mxu0 %v601
    %1018 = vmatprep.subr.mxu0 %v600
    %1019 = vmatpush1.msra.mxu0 %v599
    %1020 = vmatprep.subr.mxu0 %v598
    %1021 = vmatpush1.msra.mxu0 %v597
    %1022 = vmatprep.subr.mxu0 %v596
    %1023 = vmatpush1.msra.mxu0 %v595
    %1024 = vmatprep.subr.mxu0 %v594
    %1025 = vmatpush1.msra.mxu0 %v593
    %1026 = vmatprep.subr.mxu0 %v592
    %1027 = vmatpush1.msra.mxu0 %v591
    %1028 = vmatprep.subr.mxu0 %v590
    %1029 = vmatpush1.msra.mxu0 %v589
    %1030 = vmatprep.subr.mxu0 0.0
    %1031 = vmatpush2.msra.mxu0 0.0
    %1032 = vmatprep.subr.mxu0 0.0
    %1033 = vmatpush2.msra.mxu0 0.0
    %1034 = vmatprep.subr.mxu0 0.0
    %1035 = vmatpush2.msra.mxu0 0.0
    %1036 = vmatprep.subr.mxu0 0.0
    %1037 = vmatpush2.msra.mxu0 0.0
    %1038 = vmatprep.subr.mxu0 0.0
    %1039 = vmatpush2.msra.mxu0 0.0
    %1040 = vmatprep.subr.mxu0 0.0
    %1041 = vmatpush2.msra.mxu0 0.0
    %1042 = vmatprep.subr.mxu0 0.0
    %1043 = vmatpush2.msra.mxu0 0.0
    %1044 = vmatprep.subr.mxu0 0.0
    %1045 = vmatpush2.msra.mxu0 0.0
    %1046 = vmatprep.subr.mxu0 0.0
    %1047 = vmatpush2.msra.mxu0 0.0
    %1048 = vmatprep.subr.mxu0 0.0
    %1049 = vmatpush2.msra.mxu0 0.0
    %1050 = vmatprep.subr.mxu0 0.0
    %1051 = vmatpush2.msra.mxu0 0.0
    %1052 = vmatprep.subr.mxu0 0.0
    %1053 = vmatpush2.msra.mxu0 0.0
    %1054 = vmatprep.subr.mxu0 0.0
    %1055 = vmatpush2.msra.mxu0 0.0
    %1056 = vmatprep.subr.mxu0 0.0
    %1057 = vmatpush2.msra.mxu0 0.0
    %1058 = vmatprep.subr.mxu0 0.0
    %1059 = vmatpush2.msra.mxu0 0.0
    %1060 = vmatprep.subr.mxu0 0.0
    %1061 = vmatpush2.msra.mxu0 0.0
    %1062 = vmatprep.mubr.f32.mxu0 0.0
    %1063 = vmatmul.mubr.f32.gmra.mxu0 %v996
    %v1064 = vpop.f32.mrf.mxu0
    %v1065 = vadd.f32 0.0, %v1064
    %v1066 = vpop.f32.mrf.mxu0
    %v1067 = vadd.f32 0.0, %v1066
    %1068 = vdwg.mxu0
    %v1069 = vadd.f32 %v446, %v1065
    %v1070 = vadd.f32 %v448, %v1067
    %v1071 = vxor.u32 %v1069, 2147483648
    %v1072 = vmul.f32 %v1071, 1.442695
    %v1073 = vpow.pop %v1072
    %v1074 = vadd.f32 %v1073, 1.0
    %v1075 = vrcp.pop %v1074
    %v1076 = vmul.f32 1.0, %v1075
    %v1077 = vxor.u32 %v1070, 2147483648
    %v1078 = vmul.f32 %v1077, 1.442695
    %v1079 = vpow.pop %v1078
    %v1080 = vadd.f32 %v1079, 1.0
    %v1081 = vrcp.pop %v1080
    %v1082 = vmul.f32 1.0, %v1081
    %v1083 = vtanh.pop %v1070
    %v1084 = vsel %vm621, %v1083, %v994
    %v1085 = vmul.f32 %v1076, %v1084
    %1086 = vrot.lane.b32.xlu0 %v1085, 64
    %v1087 = vpop.permute.xlu0 %1086
    %v1088 = vadd.f32 %v1085, %v1087
    %v1089 = vtanh.pop %v1088
    %v1090 = vmul.f32 %v1082, %v1089
    %v1091 = vmax.f32 %v997, %v1090
    %1092 = vmatprep.subr.mxu0 %v620
    %1093 = vmatpush1.msra.mxu0 %v619
    %1094 = vmatprep.subr.mxu0 %v618
    %1095 = vmatpush1.msra.mxu0 %v617
    %1096 = vmatprep.subr.mxu0 %v616
    %1097 = vmatpush1.msra.mxu0 %v615
    %1098 = vmatprep.subr.mxu0 %v614
    %1099 = vmatpush1.msra.mxu0 %v613
    %1100 = vmatprep.subr.mxu0 %v612
    %1101 = vmatpush1.msra.mxu0 %v611
    %1102 = vmatprep.subr.mxu0 %v610
    %1103 = vmatpush1.msra.mxu0 %v609
    %1104 = vmatprep.subr.mxu0 %v608
    %1105 = vmatpush1.msra.mxu0 %v607
    %1106 = vmatprep.subr.mxu0 %v606
    %1107 = vmatpush1.msra.mxu0 %v605
    %1108 = vmatprep.subr.mxu0 %v604
    %1109 = vmatpush1.msra.mxu0 %v603
    %1110 = vmatprep.subr.mxu0 %v602
    %1111 = vmatpush1.msra.mxu0 %v601
    %1112 = vmatprep.subr.mxu0 %v600
    %1113 = vmatpush1.msra.mxu0 %v599
    %1114 = vmatprep.subr.mxu0 %v598
    %1115 = vmatpush1.msra.mxu0 %v597
    %1116 = vmatprep.subr.mxu0 %v596
    %1117 = vmatpush1.msra.mxu0 %v595
    %1118 = vmatprep.subr.mxu0 %v594
    %1119 = vmatpush1.msra.mxu0 %v593
    %1120 = vmatprep.subr.mxu0 %v592
    %1121 = vmatpush1.msra.mxu0 %v591
    %1122 = vmatprep.subr.mxu0 %v590
    %1123 = vmatpush1.msra.mxu0 %v589
    %1124 = vmatprep.subr.mxu0 0.0
    %1125 = vmatpush2.msra.mxu0 0.0
    %1126 = vmatprep.subr.mxu0 0.0
    %1127 = vmatpush2.msra.mxu0 0.0
    %1128 = vmatprep.subr.mxu0 0.0
    %1129 = vmatpush2.msra.mxu0 0.0
    %1130 = vmatprep.subr.mxu0 0.0
    %1131 = vmatpush2.msra.mxu0 0.0
    %1132 = vmatprep.subr.mxu0 0.0
    %1133 = vmatpush2.msra.mxu0 0.0
    %1134 = vmatprep.subr.mxu0 0.0
    %1135 = vmatpush2.msra.mxu0 0.0
    %1136 = vmatprep.subr.mxu0 0.0
    %1137 = vmatpush2.msra.mxu0 0.0
    %1138 = vmatprep.subr.mxu0 0.0
    %1139 = vmatpush2.msra.mxu0 0.0
    %1140 = vmatprep.subr.mxu0 0.0
    %1141 = vmatpush2.msra.mxu0 0.0
    %1142 = vmatprep.subr.mxu0 0.0
    %1143 = vmatpush2.msra.mxu0 0.0
    %1144 = vmatprep.subr.mxu0 0.0
    %1145 = vmatpush2.msra.mxu0 0.0
    %1146 = vmatprep.subr.mxu0 0.0
    %1147 = vmatpush2.msra.mxu0 0.0
    %1148 = vmatprep.subr.mxu0 0.0
    %1149 = vmatpush2.msra.mxu0 0.0
    %1150 = vmatprep.subr.mxu0 0.0
    %1151 = vmatpush2.msra.mxu0 0.0
    %1152 = vmatprep.subr.mxu0 0.0
    %1153 = vmatpush2.msra.mxu0 0.0
    %1154 = vmatprep.subr.mxu0 0.0
    %1155 = vmatpush2.msra.mxu0 0.0
    %1156 = vmatprep.mubr.f32.mxu0 0.0
    %1157 = vmatmul.mubr.f32.gmra.mxu0 %v1090
    %v1158 = vpop.f32.mrf.mxu0
    %v1159 = vadd.f32 0.0, %v1158
    %v1160 = vpop.f32.mrf.mxu0
    %v1161 = vadd.f32 0.0, %v1160
    %1162 = vdwg.mxu0
    %v1163 = vadd.f32 %v452, %v1159
    %v1164 = vadd.f32 %v454, %v1161
    %v1165 = vxor.u32 %v1163, 2147483648
    %v1166 = vmul.f32 %v1165, 1.442695
    %v1167 = vpow.pop %v1166
    %v1168 = vadd.f32 %v1167, 1.0
    %v1169 = vrcp.pop %v1168
    %v1170 = vmul.f32 1.0, %v1169
    %v1171 = vxor.u32 %v1164, 2147483648
    %v1172 = vmul.f32 %v1171, 1.442695
    %v1173 = vpow.pop %v1172
    %v1174 = vadd.f32 %v1173, 1.0
    %v1175 = vrcp.pop %v1174
    %v1176 = vmul.f32 1.0, %v1175
    %v1177 = vtanh.pop %v1164
    %v1178 = vsel %vm621, %v1177, %v1088
    %v1179 = vmul.f32 %v1170, %v1178
    %1180 = vrot.lane.b32.xlu0 %v1179, 64
    %v1181 = vpop.permute.xlu0 %1180
    %v1182 = vadd.f32 %v1179, %v1181
    %v1183 = vtanh.pop %v1182
    %v1184 = vmul.f32 %v1176, %v1183
    %v1185 = vmax.f32 %v1091, %v1184
    %1186 = vmatprep.subr.mxu0 %v620
    %1187 = vmatpush1.msra.mxu0 %v619
    %1188 = vmatprep.subr.mxu0 %v618
    %1189 = vmatpush1.msra.mxu0 %v617
    %1190 = vmatprep.subr.mxu0 %v616
    %1191 = vmatpush1.msra.mxu0 %v615
    %1192 = vmatprep.subr.mxu0 %v614
    %1193 = vmatpush1.msra.mxu0 %v613
    %1194 = vmatprep.subr.mxu0 %v612
    %1195 = vmatpush1.msra.mxu0 %v611
    %1196 = vmatprep.subr.mxu0 %v610
    %1197 = vmatpush1.msra.mxu0 %v609
    %1198 = vmatprep.subr.mxu0 %v608
    %1199 = vmatpush1.msra.mxu0 %v607
    %1200 = vmatprep.subr.mxu0 %v606
    %1201 = vmatpush1.msra.mxu0 %v605
    %1202 = vmatprep.subr.mxu0 %v604
    %1203 = vmatpush1.msra.mxu0 %v603
    %1204 = vmatprep.subr.mxu0 %v602
    %1205 = vmatpush1.msra.mxu0 %v601
    %1206 = vmatprep.subr.mxu0 %v600
    %1207 = vmatpush1.msra.mxu0 %v599
    %1208 = vmatprep.subr.mxu0 %v598
    %1209 = vmatpush1.msra.mxu0 %v597
    %1210 = vmatprep.subr.mxu0 %v596
    %1211 = vmatpush1.msra.mxu0 %v595
    %1212 = vmatprep.subr.mxu0 %v594
    %1213 = vmatpush1.msra.mxu0 %v593
    %1214 = vmatprep.subr.mxu0 %v592
    %1215 = vmatpush1.msra.mxu0 %v591
    %1216 = vmatprep.subr.mxu0 %v590
    %1217 = vmatpush1.msra.mxu0 %v589
    %1218 = vmatprep.subr.mxu0 0.0
    %1219 = vmatpush2.msra.mxu0 0.0
    %1220 = vmatprep.subr.mxu0 0.0
    %1221 = vmatpush2.msra.mxu0 0.0
    %1222 = vmatprep.subr.mxu0 0.0
    %1223 = vmatpush2.msra.mxu0 0.0
    %1224 = vmatprep.subr.mxu0 0.0
    %1225 = vmatpush2.msra.mxu0 0.0
    %1226 = vmatprep.subr.mxu0 0.0
    %1227 = vmatpush2.msra.mxu0 0.0
    %1228 = vmatprep.subr.mxu0 0.0
    %1229 = vmatpush2.msra.mxu0 0.0
    %1230 = vmatprep.subr.mxu0 0.0
    %1231 = vmatpush2.msra.mxu0 0.0
    %1232 = vmatprep.subr.mxu0 0.0
    %1233 = vmatpush2.msra.mxu0 0.0
    %1234 = vmatprep.subr.mxu0 0.0
    %1235 = vmatpush2.msra.mxu0 0.0
    %1236 = vmatprep.subr.mxu0 0.0
    %1237 = vmatpush2.msra.mxu0 0.0
    %1238 = vmatprep.subr.mxu0 0.0
    %1239 = vmatpush2.msra.mxu0 0.0
    %1240 = vmatprep.subr.mxu0 0.0
    %1241 = vmatpush2.msra.mxu0 0.0
    %1242 = vmatprep.subr.mxu0 0.0
    %1243 = vmatpush2.msra.mxu0 0.0
    %1244 = vmatprep.subr.mxu0 0.0
    %1245 = vmatpush2.msra.mxu0 0.0
    %1246 = vmatprep.subr.mxu0 0.0
    %1247 = vmatpush2.msra.mxu0 0.0
    %1248 = vmatprep.subr.mxu0 0.0
    %1249 = vmatpush2.msra.mxu0 0.0
    %1250 = vmatprep.mubr.f32.mxu0 0.0
    %1251 = vmatmul.mubr.f32.gmra.mxu0 %v1184
    %v1252 = vpop.f32.mrf.mxu0
    %v1253 = vadd.f32 0.0, %v1252
    %v1254 = vpop.f32.mrf.mxu0
    %v1255 = vadd.f32 0.0, %v1254
    %1256 = vdwg.mxu0
    %v1257 = vadd.f32 %v458, %v1253
    %v1258 = vadd.f32 %v460, %v1255
    %v1259 = vxor.u32 %v1257, 2147483648
    %v1260 = vmul.f32 %v1259, 1.442695
    %v1261 = vpow.pop %v1260
    %v1262 = vadd.f32 %v1261, 1.0
    %v1263 = vrcp.pop %v1262
    %v1264 = vmul.f32 1.0, %v1263
    %v1265 = vxor.u32 %v1258, 2147483648
    %v1266 = vmul.f32 %v1265, 1.442695
    %v1267 = vpow.pop %v1266
    %v1268 = vadd.f32 %v1267, 1.0
    %v1269 = vrcp.pop %v1268
    %v1270 = vmul.f32 1.0, %v1269
    %v1271 = vtanh.pop %v1258
    %v1272 = vsel %vm621, %v1271, %v1182
    %v1273 = vmul.f32 %v1264, %v1272
    %1274 = vrot.lane.b32.xlu0 %v1273, 64
    %v1275 = vpop.permute.xlu0 %1274
    %v1276 = vadd.f32 %v1273, %v1275
    %v1277 = vtanh.pop %v1276
    %v1278 = vmul.f32 %v1270, %v1277
    %v1279 = vmax.f32 %v1185, %v1278
    %1280 = vmatprep.subr.mxu0 %v620
    %1281 = vmatpush1.msra.mxu0 %v619
    %1282 = vmatprep.subr.mxu0 %v618
    %1283 = vmatpush1.msra.mxu0 %v617
    %1284 = vmatprep.subr.mxu0 %v616
    %1285 = vmatpush1.msra.mxu0 %v615
    %1286 = vmatprep.subr.mxu0 %v614
    %1287 = vmatpush1.msra.mxu0 %v613
    %1288 = vmatprep.subr.mxu0 %v612
    %1289 = vmatpush1.msra.mxu0 %v611
    %1290 = vmatprep.subr.mxu0 %v610
    %1291 = vmatpush1.msra.mxu0 %v609
    %1292 = vmatprep.subr.mxu0 %v608
    %1293 = vmatpush1.msra.mxu0 %v607
    %1294 = vmatprep.subr.mxu0 %v606
    %1295 = vmatpush1.msra.mxu0 %v605
    %1296 = vmatprep.subr.mxu0 %v604
    %1297 = vmatpush1.msra.mxu0 %v603
    %1298 = vmatprep.subr.mxu0 %v602
    %1299 = vmatpush1.msra.mxu0 %v601
    %1300 = vmatprep.subr.mxu0 %v600
    %1301 = vmatpush1.msra.mxu0 %v599
    %1302 = vmatprep.subr.mxu0 %v598
    %1303 = vmatpush1.msra.mxu0 %v597
    %1304 = vmatprep.subr.mxu0 %v596
    %1305 = vmatpush1.msra.mxu0 %v595
    %1306 = vmatprep.subr.mxu0 %v594
    %1307 = vmatpush1.msra.mxu0 %v593
    %1308 = vmatprep.subr.mxu0 %v592
    %1309 = vmatpush1.msra.mxu0 %v591
    %1310 = vmatprep.subr.mxu0 %v590
    %1311 = vmatpush1.msra.mxu0 %v589
    %1312 = vmatprep.subr.mxu0 0.0
    %1313 = vmatpush2.msra.mxu0 0.0
    %1314 = vmatprep.subr.mxu0 0.0
    %1315 = vmatpush2.msra.mxu0 0.0
    %1316 = vmatprep.subr.mxu0 0.0
    %1317 = vmatpush2.msra.mxu0 0.0
    %1318 = vmatprep.subr.mxu0 0.0
    %1319 = vmatpush2.msra.mxu0 0.0
    %1320 = vmatprep.subr.mxu0 0.0
    %1321 = vmatpush2.msra.mxu0 0.0
    %1322 = vmatprep.subr.mxu0 0.0
    %1323 = vmatpush2.msra.mxu0 0.0
    %1324 = vmatprep.subr.mxu0 0.0
    %1325 = vmatpush2.msra.mxu0 0.0
    %1326 = vmatprep.subr.mxu0 0.0
    %1327 = vmatpush2.msra.mxu0 0.0
    %1328 = vmatprep.subr.mxu0 0.0
    %1329 = vmatpush2.msra.mxu0 0.0
    %1330 = vmatprep.subr.mxu0 0.0
    %1331 = vmatpush2.msra.mxu0 0.0
    %1332 = vmatprep.subr.mxu0 0.0
    %1333 = vmatpush2.msra.mxu0 0.0
    %1334 = vmatprep.subr.mxu0 0.0
    %1335 = vmatpush2.msra.mxu0 0.0
    %1336 = vmatprep.subr.mxu0 0.0
    %1337 = vmatpush2.msra.mxu0 0.0
    %1338 = vmatprep.subr.mxu0 0.0
    %1339 = vmatpush2.msra.mxu0 0.0
    %1340 = vmatprep.subr.mxu0 0.0
    %1341 = vmatpush2.msra.mxu0 0.0
    %1342 = vmatprep.subr.mxu0 0.0
    %1343 = vmatpush2.msra.mxu0 0.0
    %1344 = vmatprep.mubr.f32.mxu0 0.0
    %1345 = vmatmul.mubr.f32.gmra.mxu0 %v1278
    %v1346 = vpop.f32.mrf.mxu0
    %v1347 = vadd.f32 0.0, %v1346
    %v1348 = vpop.f32.mrf.mxu0
    %v1349 = vadd.f32 0.0, %v1348
    %1350 = vdwg.mxu0
    %v1351 = vadd.f32 %v464, %v1347
    %v1352 = vadd.f32 %v466, %v1349
    %v1353 = vxor.u32 %v1351, 2147483648
    %v1354 = vmul.f32 %v1353, 1.442695
    %v1355 = vpow.pop %v1354
    %v1356 = vadd.f32 %v1355, 1.0
    %v1357 = vrcp.pop %v1356
    %v1358 = vmul.f32 1.0, %v1357
    %v1359 = vxor.u32 %v1352, 2147483648
    %v1360 = vmul.f32 %v1359, 1.442695
    %v1361 = vpow.pop %v1360
    %v1362 = vadd.f32 %v1361, 1.0
    %v1363 = vrcp.pop %v1362
    %v1364 = vmul.f32 1.0, %v1363
    %v1365 = vtanh.pop %v1352
    %v1366 = vsel %vm621, %v1365, %v1276
    %v1367 = vmul.f32 %v1358, %v1366
    %1368 = vrot.lane.b32.xlu0 %v1367, 64
    %v1369 = vpop.permute.xlu0 %1368
    %v1370 = vadd.f32 %v1367, %v1369
    %v1371 = vtanh.pop %v1370
    %v1372 = vmul.f32 %v1364, %v1371
    %v1373 = vmax.f32 %v1279, %v1372
    %v1374 = vld [vmem:[%s6] sm:$0xff]
    %v1375 = vld [vmem:[%s6 + $0x8] sm:$0xff]
    %v1376 = vld [vmem:[%s6 + $0x10] sm:$0xff]
    %v1377 = vld [vmem:[%s6 + $0x18] sm:$0xff]
    %v1378 = vld [vmem:[%s7] sm:$0xff]
    %v1379 = vld [vmem:[%s7 + $0x8] sm:$0xff]
    %v1380 = vld [vmem:[%s7 + $0x10] sm:$0xff]
    %v1381 = vld [vmem:[%s7 + $0x18] sm:$0xff]
    %v1382 = vld [vmem:[%s7 + $0x20] sm:$0xff]
    %v1383 = vld [vmem:[%s7 + $0x28] sm:$0xff]
    %v1384 = vld [vmem:[%s7 + $0x30] sm:$0xff]
    %v1385 = vld [vmem:[%s7 + $0x38] sm:$0xff]
    %v1386 = vld [vmem:[%s7 + $0x40] sm:$0xff]
    %v1387 = vld [vmem:[%s7 + $0x48] sm:$0xff]
    %v1388 = vld [vmem:[%s7 + $0x50] sm:$0xff]
    %v1389 = vld [vmem:[%s7 + $0x58] sm:$0xff]
    %v1390 = vld [vmem:[%s7 + $0x60] sm:$0xff]
    %v1391 = vld [vmem:[%s7 + $0x68] sm:$0xff]
    %v1392 = vld [vmem:[%s7 + $0x70] sm:$0xff]
    %v1393 = vld [vmem:[%s7 + $0x78] sm:$0xff]
    %1394 = vmatprep.subr.mxu0 0.0
    %1395 = vmatpush1.msra.mxu0 %v1393
    %1396 = vmatprep.subr.mxu0 0.0
    %1397 = vmatpush1.msra.mxu0 %v1392
    %1398 = vmatprep.subr.mxu0 0.0
    %1399 = vmatpush1.msra.mxu0 %v1391
    %1400 = vmatprep.subr.mxu0 0.0
    %1401 = vmatpush1.msra.mxu0 %v1390
    %1402 = vmatprep.subr.mxu0 0.0
    %1403 = vmatpush1.msra.mxu0 %v1389
    %1404 = vmatprep.subr.mxu0 0.0
    %1405 = vmatpush1.msra.mxu0 %v1388
    %1406 = vmatprep.subr.mxu0 0.0
    %1407 = vmatpush1.msra.mxu0 %v1387
    %1408 = vmatprep.subr.mxu0 0.0
    %1409 = vmatpush1.msra.mxu0 %v1386
    %1410 = vmatprep.subr.mxu0 0.0
    %1411 = vmatpush1.msra.mxu0 %v1385
    %1412 = vmatprep.subr.mxu0 0.0
    %1413 = vmatpush1.msra.mxu0 %v1384
    %1414 = vmatprep.subr.mxu0 0.0
    %1415 = vmatpush1.msra.mxu0 %v1383
    %1416 = vmatprep.subr.mxu0 0.0
    %1417 = vmatpush1.msra.mxu0 %v1382
    %1418 = vmatprep.subr.mxu0 0.0
    %1419 = vmatpush1.msra.mxu0 %v1381
    %1420 = vmatprep.subr.mxu0 0.0
    %1421 = vmatpush1.msra.mxu0 %v1380
    %1422 = vmatprep.subr.mxu0 0.0
    %1423 = vmatpush1.msra.mxu0 %v1379
    %1424 = vmatprep.subr.mxu0 0.0
    %1425 = vmatpush1.msra.mxu0 %v1378
    %1426 = vmatprep.subr.mxu0 0.0
    %1427 = vmatpush2.msra.mxu0 0.0
    %1428 = vmatprep.subr.mxu0 0.0
    %1429 = vmatpush2.msra.mxu0 0.0
    %1430 = vmatprep.subr.mxu0 0.0
    %1431 = vmatpush2.msra.mxu0 0.0
    %1432 = vmatprep.subr.mxu0 0.0
    %1433 = vmatpush2.msra.mxu0 0.0
    %1434 = vmatprep.subr.mxu0 0.0
    %1435 = vmatpush2.msra.mxu0 0.0
    %1436 = vmatprep.subr.mxu0 0.0
    %1437 = vmatpush2.msra.mxu0 0.0
    %1438 = vmatprep.subr.mxu0 0.0
    %1439 = vmatpush2.msra.mxu0 0.0
    %1440 = vmatprep.subr.mxu0 0.0
    %1441 = vmatpush2.msra.mxu0 0.0
    %1442 = vmatprep.subr.mxu0 0.0
    %1443 = vmatpush2.msra.mxu0 0.0
    %1444 = vmatprep.subr.mxu0 0.0
    %1445 = vmatpush2.msra.mxu0 0.0
    %1446 = vmatprep.subr.mxu0 0.0
    %1447 = vmatpush2.msra.mxu0 0.0
    %1448 = vmatprep.subr.mxu0 0.0
    %1449 = vmatpush2.msra.mxu0 0.0
    %1450 = vmatprep.subr.mxu0 0.0
    %1451 = vmatpush2.msra.mxu0 0.0
    %1452 = vmatprep.subr.mxu0 0.0
    %1453 = vmatpush2.msra.mxu0 0.0
    %1454 = vmatprep.subr.mxu0 0.0
    %1455 = vmatpush2.msra.mxu0 0.0
    %1456 = vmatprep.subr.mxu0 0.0
    %1457 = vmatpush2.msra.mxu0 0.0
    %1458 = vmatprep.mubr.f32.mxu0 0.0
    %1459 = vmatmul.mubr.f32.gmra.mxu0 %v1373
    %v1460 = vpop.f32.mrf.mxu0
    %v1461 = vadd.f32 0.0, %v1460
    %v1462 = vpop.f32.mrf.mxu0
    %1463 = vdwg.mxu0
    %vm1464 = vcmask 261120
    %v1466 = vsel %vm1464, %v588, 0
    %1468 = vmatprep.subr.mxu0 0.0
    %1469 = vmatpush1.msra.mxu0 0.0
    %1470 = vmatprep.subr.mxu0 0.0
    %1471 = vmatpush1.msra.mxu0 0.0
    %1472 = vmatprep.subr.mxu0 0.0
    %1473 = vmatpush1.msra.mxu0 0.0
    %1474 = vmatprep.subr.mxu0 0.0
    %1475 = vmatpush1.msra.mxu0 0.0
    %1476 = vmatprep.subr.mxu0 0.0
    %1477 = vmatpush1.msra.mxu0 0.0
    %1478 = vmatprep.subr.mxu0 0.0
    %1479 = vmatpush1.msra.mxu0 0.0
    %1480 = vmatprep.subr.mxu0 0.0
    %1481 = vmatpush1.msra.mxu0 0.0
    %1482 = vmatprep.subr.mxu0 0.0
    %1483 = vmatpush1.msra.mxu0 0.0
    %1484 = vmatprep.subr.mxu0 0.0
    %1485 = vmatpush1.msra.mxu0 0.0
    %1486 = vmatprep.subr.mxu0 0.0
    %1487 = vmatpush1.msra.mxu0 0.0
    %1488 = vmatprep.subr.mxu0 0.0
    %1489 = vmatpush1.msra.mxu0 0.0
    %1490 = vmatprep.subr.mxu0 0.0
    %1491 = vmatpush1.msra.mxu0 0.0
    %1492 = vmatprep.subr.mxu0 0.0
    %1493 = vmatpush1.msra.mxu0 %v1377
    %1494 = vmatprep.subr.mxu0 0.0
    %1495 = vmatpush1.msra.mxu0 %v1376
    %1496 = vmatprep.subr.mxu0 0.0
    %1497 = vmatpush1.msra.mxu0 %v1375
    %1498 = vmatprep.subr.mxu0 0.0
    %1499 = vmatpush1.msra.mxu0 %v1374
    %1500 = vmatprep.subr.mxu0 0.0
    %1501 = vmatpush2.msra.mxu0 0.0
    %1502 = vmatprep.subr.mxu0 0.0
    %1503 = vmatpush2.msra.mxu0 0.0
    %1504 = vmatprep.subr.mxu0 0.0
    %1505 = vmatpush2.msra.mxu0 0.0
    %1506 = vmatprep.subr.mxu0 0.0
    %1507 = vmatpush2.msra.mxu0 0.0
    %1508 = vmatprep.subr.mxu0 0.0
    %1509 = vmatpush2.msra.mxu0 0.0
    %1510 = vmatprep.subr.mxu0 0.0
    %1511 = vmatpush2.msra.mxu0 0.0
    %1512 = vmatprep.subr.mxu0 0.0
    %1513 = vmatpush2.msra.mxu0 0.0
    %1514 = vmatprep.subr.mxu0 0.0
    %1515 = vmatpush2.msra.mxu0 0.0
    %1516 = vmatprep.subr.mxu0 0.0
    %1517 = vmatpush2.msra.mxu0 0.0
    %1518 = vmatprep.subr.mxu0 0.0
    %1519 = vmatpush2.msra.mxu0 0.0
    %1520 = vmatprep.subr.mxu0 0.0
    %1521 = vmatpush2.msra.mxu0 0.0
    %1522 = vmatprep.subr.mxu0 0.0
    %1523 = vmatpush2.msra.mxu0 0.0
    %1524 = vmatprep.subr.mxu0 0.0
    %1525 = vmatpush2.msra.mxu0 0.0
    %1526 = vmatprep.subr.mxu0 0.0
    %1527 = vmatpush2.msra.mxu0 0.0
    %1528 = vmatprep.subr.mxu0 0.0
    %1529 = vmatpush2.msra.mxu0 0.0
    %1530 = vmatprep.subr.mxu0 0.0
    %1531 = vmatpush2.msra.mxu0 0.0
    %1532 = vmatprep.mubr.f32.mxu0 0.0
    %1533 = vmatmul.mubr.f32.gmra.mxu0 %v1466
    %v1534 = vpop.f32.mrf.mxu0
    %v1535 = vadd.f32 %v1461, %v1534
    %v1536 = vpop.f32.mrf.mxu0
    %1537 = vdwg.mxu0
    %v1538 = vld [vmem:[%s8] sm:$0x1]
    %v1540 = vlaneseq
    %v1541 = vshrl.u32 %v1540, 7
    %v1542 = vsub.s32 0, %v1541
    %v1543 = vrot.slane %v1538, %v1542
    %v1545 = vadd.f32 %v1535, %v1543
    %vm1546 = vcmask 25600
    %1547 = vst.msk [vmem:[#allocation5] sm:$0x3] %vm1546, %v1545
    // Predicated region
    $region42: #{textrcnn_forward.1} parent=1 // pred_check
      _
    $region43: #{textrcnn_forward.1} parent=1 // pred_check_branch
      %1549 = sbr.rel (0) target = $region45
    $region44: #{textrcnn_forward.1} parent=1 // pred_region
      %s1551 = ssub.s32 32, 32
      %1552 = vsyncadd [#allocation4], %s1551
      %s1554 = sshll.u32 [#allocation5], 4
      %s1555 = int_to_ptr.vmem [resolvable:$true] %s1554
      %1557 = dma.vmem_to_hbm [thread:$0]  %s1555, 32, %s9, [#allocation4]
    $region45: #{textrcnn_forward.1} parent=1 // pred_fallthru
      _
    // Predicated region
    $region46: #{textrcnn_forward.1} parent=1 // pred_check
      _
    $region47: #{textrcnn_forward.1} parent=1 // pred_check_branch
      %1559 = sbr.rel (0) target = $region49
    $region48: #{textrcnn_forward.1} parent=1 // pred_region
      %1560 = dma.done [#allocation4], 32
    $region49: #{textrcnn_forward.1} parent=1 // pred_fallthru
      _
    %1561 = vsyncpa [#allocation3], 1
    %1562 = vsyncpa [#allocation4], 1

</llo_original>
